<compile_context>
chip_gen: v7x
topology: tpu7x:2x2x1
jax: 0.10.0
libtpu: 0.0.40
codegen_flags: <defaults>
</compile_context>

<pallas_src>
import jax
import jax.numpy as jnp
from jax.experimental import pallas as pl
from jax.experimental.pallas import tpu as pltpu


# ----------------------------- fused Pallas kernel -----------------------------

def _fused_daud_kernel(sel_ref,                 # (B,) int32 in SMEM (scalar prefetch)
                       xt_ref, dom_ref,
                       ew1_ref, eb1_ref, ew2_ref, eb2_ref, ew3_ref, eb3_ref,
                       dw1_ref, db1_ref, dw2_ref, db2_ref, dw3_ref, db3_ref,
                       xhat_ref, z_ref):
    """Encoder -> (+ selected domain latent) -> Decoder, one lane-dense row tile.

    All activations are (feature, TM): rows in lanes, features in sublanes.
    sel_ref is consumed by the dom BlockSpec index_map (domain selection).
    """
    xt = xt_ref[0, :, :]                                              # (Din, TM)

    # Encoder: h^T = relu(W^T x^T + b), biases are (feature, 1) lane splats.
    h = jnp.maximum(
        jnp.dot(ew1_ref[...], xt, preferred_element_type=jnp.float32)
        + eb1_ref[...], 0.0)
    h = jnp.maximum(
        jnp.dot(ew2_ref[...], h, preferred_element_type=jnp.float32)
        + eb2_ref[...], 0.0)
    zt = jnp.dot(ew3_ref[...], h, preferred_element_type=jnp.float32) + eb3_ref[...]
    z_ref[0, :, :] = zt                                               # lane-dense store

    # Decoder on (z + selected domain latent); latent never leaves VMEM.
    zin = zt + dom_ref[:, 0:1]                                        # (L, 1) lane splat
    h = jnp.maximum(
        jnp.dot(dw1_ref[...], zin, preferred_element_type=jnp.float32)
        + db1_ref[...], 0.0)
    h = jnp.maximum(
        jnp.dot(dw2_ref[...], h, preferred_element_type=jnp.float32)
        + db2_ref[...], 0.0)
    xhat_ref[0, :, :] = (jnp.dot(dw3_ref[...], h,
                                 preferred_element_type=jnp.float32)
                         + db3_ref[...])                              # lane-dense store


# ----------------------------- pallas_call wrapper -----------------------------

def _round_up(n, m):
    return ((n + m - 1) // m) * m


def _choose_tm(S, B, tm_max=1024, min_steps=4):
    """Row-tile length (lanes). Multiple of 128, <= tm_max, and small enough to
    keep >= min_steps grid steps when possible (v7x megacore load balance)."""
    s_tiles_wanted = max(1, -(-min_steps // max(B, 1)))   # ceil(min_steps / B)
    tm = _round_up(max(1, -(-S // s_tiles_wanted)), 128)  # ceil(S / tiles) -> x128
    tm = min(tm, tm_max)
    tm = min(tm, _round_up(S, 128))
    return tm


def fused_daud_forward(x, sel, enc_params, dec_params, doms, *, tm_max=1024):
    """x: (B, S, Din) f32; sel: (B,) int32 selected-domain index; doms: (N, L)."""
    ew1, eb1, ew2, eb2, ew3, eb3 = enc_params
    dw1, db1, dw2, db2, dw3, db3 = dec_params
    B, S, Din = x.shape
    H = ew1.shape[1]
    L = ew3.shape[1]
    Dout = dw3.shape[1]
    N = doms.shape[0]

    TM = _choose_tm(S, B, tm_max=tm_max)
    Spad = _round_up(S, TM)
    s_tiles = Spad // TM

    # Lane-dense input: rows (S) in lanes. XLA transpose = layout plumbing.
    xt = jnp.swapaxes(x, 1, 2)                                        # (B, Din, S)
    if Spad != S:
        xt = jnp.pad(xt, ((0, 0), (0, 0), (0, Spad - S)))

    # Domain-latent table: one full 128-lane block per domain so the index_map
    # can select it with the scalar-prefetched `sel` (no (M, L) HBM broadcast).
    doms_lane = jnp.broadcast_to(doms.T[:, :, None], (L, N, 128)).reshape(L, N * 128)

    # Transposed, VMEM-resident weights; biases as (feature, 1) lane splats.
    wts = (ew1.T, eb1.T, ew2.T, eb2.T, ew3.T, eb3.T,
           dw1.T, db1.T, dw2.T, db2.T, dw3.T, db3.T)

    def full_spec(a):
        return pl.BlockSpec(a.shape, lambda b, s, sp: (0, 0))

    def row_out_spec(d):
        return pl.BlockSpec((1, d, TM), lambda b, s, sp: (b, 0, s))

    layer_flops = Din * H + H * H + H * L + L * H + H * H + H * Dout
    weight_elems = sum(int(w.size) for w in wts)
    cost = pl.CostEstimate(
        flops=int(2 * B * Spad * layer_flops),
        transcendentals=0,
        bytes_accessed=int(4 * (B * Spad * (Din + L + Dout)
                                + weight_elems + L * N * 128 + B)))

    xhat_t, z_t = pl.pallas_call(
        _fused_daud_kernel,
        out_shape=(jax.ShapeDtypeStruct((B, Dout, Spad), jnp.float32),
                   jax.ShapeDtypeStruct((B, L, Spad), jnp.float32)),
        grid_spec=pltpu.PrefetchScalarGridSpec(
            num_scalar_prefetch=1,
            grid=(B, s_tiles),
            in_specs=[
                pl.BlockSpec((1, Din, TM), lambda b, s, sp: (b, 0, s)),  # x^T tile
                pl.BlockSpec((L, 128), lambda b, s, sp: (0, sp[b])),     # selected dom
                *(full_spec(w) for w in wts),                            # weights/biases
            ],
            out_specs=(row_out_spec(Dout), row_out_spec(L)),
        ),
        compiler_params=pltpu.CompilerParams(
            dimension_semantics=("parallel", "parallel")),
        cost_estimate=cost,
    )(sel, xt, doms_lane, *wts)

    xhat = jnp.swapaxes(xhat_t[:, :, :S], 1, 2)                       # (B, S, Dout)
    z = jnp.swapaxes(z_t[:, :, :S], 1, 2)                             # (B, S, L)
    return xhat, z


# ----------------------------- parameter init (deterministic) -----------------------------

def _linear_params(key, fan_in, fan_out):
    kw, kb = jax.random.split(key)
    bound = 1.0 / jnp.sqrt(jnp.float32(fan_in))
    w = jax.random.uniform(kw, (fan_in, fan_out), jnp.float32, -bound, bound)
    b = jax.random.uniform(kb, (1, fan_out), jnp.float32, -bound, bound)
    return w, b


def init_daud_params(key, input_dim, hidden_dim, latent_dim, output_dim,
                     num_domains):
    keys = jax.random.split(key, 6)
    ew1, eb1 = _linear_params(keys[0], input_dim, hidden_dim)
    ew2, eb2 = _linear_params(keys[1], hidden_dim, hidden_dim)
    ew3, eb3 = _linear_params(keys[2], hidden_dim, latent_dim)
    dw1, db1 = _linear_params(keys[3], latent_dim, hidden_dim)
    dw2, db2 = _linear_params(keys[4], hidden_dim, hidden_dim)
    dw3, db3 = _linear_params(keys[5], hidden_dim, output_dim)
    enc = (ew1, eb1, ew2, eb2, ew3, eb3)
    dec = (dw1, db1, dw2, db2, dw3, db3)
    # domain_parameters = [ones(latent), zeros(latent)] * num_domains
    domain_pairs = [(jnp.ones((latent_dim,), jnp.float32),
                     jnp.zeros((latent_dim,), jnp.float32))
                    for _ in range(num_domains)]
    return enc, dec, domain_pairs


# ----------------------------- domain-latent helpers -----------------------------

def _domain_latents(domain_mus, domain_logvars, noise_key):
    """[reparam(zeros, zeros)] + [reparam(mu_d, exp(0.5*logvar_d)) per domain]."""
    num_domains, L = domain_mus.shape
    keys = jax.random.split(noise_key, num_domains + 1)
    dom_list = []
    for d in range(num_domains):
        eps = jax.random.normal(keys[d], (L,), jnp.float32)
        dom_list.append(domain_mus[d] + jnp.exp(0.5 * domain_logvars[d]) * eps)
    eps0 = jax.random.normal(keys[num_domains], (L,), jnp.float32)
    dom_list.insert(0, jnp.zeros((L,), jnp.float32)
                    + jnp.zeros((L,), jnp.float32) * eps0)
    return dom_list


# ----------------------------- full forward -----------------------------

@jax.jit
def daud_v2_forward(x, i, enc_params, dec_params, domain_mus, domain_logvars,
                    noise_key):
    """x: (B, S, input_dim) f32; i: (B,) int32 domain index per batch element."""
    B, S, Din = x.shape
    num_domains, L = domain_mus.shape
    N = num_domains + 1

    dom_list = _domain_latents(domain_mus, domain_logvars, noise_key)
    doms = jnp.stack(dom_list, axis=0)                                # (N, L)

    # torch where-cascade reduced to a per-batch index.  The cascade
    #   x_hat = x_hats[0]; for j in 1..N-1: x_hat = where(i==j, x_hat, x_hats[j])
    # looks like a bug but is reproduced exactly: e.g. for N=3, i==2 selects
    # x_hats[1] and i in {0,1} selects x_hats[2].  Since the decoder is
    # deterministic, decoding only the selected latent == decoding all + select.
    sel = jnp.zeros((B,), jnp.int32)
    for j in range(1, N):
        sel = jnp.where(i == j, sel, jnp.int32(j))

    return fused_daud_forward(x, sel, enc_params, dec_params, doms)


# ----------------------------- pure-JAX reference (mirrors torch forward) -----------------------------

def _linear_ref(x, w, b):
    return jnp.dot(x, w, precision=jax.lax.Precision.HIGHEST) + b


def _mlp_ref(x, params):
    w1, b1, w2, b2, w3, b3 = params
    h = jnp.maximum(_linear_ref(x, w1, b1), 0.0)
    h = jnp.maximum(_linear_ref(h, w2, b2), 0.0)
    return _linear_ref(h, w3, b3)


def daud_v2_reference(x, i, enc_params, dec_params, domain_mus, domain_logvars,
                      noise_key):
    z = _mlp_ref(x, enc_params)                                       # (B, S, L)
    dom_list = _domain_latents(domain_mus, domain_logvars, noise_key)
    x_hats = [_mlp_ref(z + dom, dec_params) for dom in dom_list]
    x_hat = x_hats[0]
    for j in range(1, len(x_hats)):
        mask = (i == j)[:, None, None]                                # unsqueeze(1).unsqueeze(2)
        x_hat = jnp.where(mask, x_hat, x_hats[j])
    return x_hat, z


# ----------------------------- main -----------------------------

if __name__ == "__main__":
    input_dim, hidden_dim, latent_dim, output_dim = 32, 32, 16, 32
    num_domains = 2

    root = jax.random.PRNGKey(0)
    k_param, k_x, k_noise = jax.random.split(root, 3)

    enc_params, dec_params, domain_pairs = init_daud_params(
        k_param, input_dim, hidden_dim, latent_dim, output_dim, num_domains)
    domain_mus = jnp.stack([p[0] for p in domain_pairs])              # (num_domains, L)
    domain_logvars = jnp.stack([p[1] for p in domain_pairs])          # (num_domains, L)
    # third return value of the torch module: the flat list of domain params
    mus_list = [p for pair in domain_pairs for p in pair]
    assert len(mus_list) == 2 * num_domains

    def _run_and_check(B, S, i_list, kx, kn, tag):
        x = jax.random.normal(kx, (B, S, input_dim), jnp.float32)
        i = jnp.array(i_list, dtype=jnp.int32)
        x_hat, z = daud_v2_forward(x, i, enc_params, dec_params,
                                   domain_mus, domain_logvars, kn)
        jax.block_until_ready((x_hat, z))
        assert x_hat.shape == (B, S, output_dim)
        assert z.shape == (B, S, latent_dim)
        x_hat_ref, z_ref = daud_v2_reference(x, i, enc_params, dec_params,
                                             domain_mus, domain_logvars, kn)
        err_x = float(jnp.max(jnp.abs(x_hat - x_hat_ref)))
        err_z = float(jnp.max(jnp.abs(z - z_ref)))
        assert err_x < 5e-2, f"{tag}: x_hat mismatch, max abs err {err_x}"
        assert err_z < 5e-2, f"{tag}: z mismatch, max abs err {err_z}"

    # small (single tile, padded lanes), medium (multi-tile pipeline), ragged
    _run_and_check(2, 8, [0, 1], k_x, k_noise, "small")
    k_x2, k_n2 = jax.random.split(jax.random.PRNGKey(1))
    _run_and_check(2, 512, [1, 2], k_x2, k_n2, "medium")
    k_x3, k_n3 = jax.random.split(jax.random.PRNGKey(2))
    _run_and_check(3, 7, [0, 1, 2], k_x3, k_n3, "padded")

    print("KERNEL_OK")
</pallas_src>

<mosaic_0001>
module attributes {stable_mosaic.version = 11 : i64} {
  func.func @_fused_daud_kernel(%arg0: i32, %arg1: i32, %arg2: memref<2xi32, #tpu.memory_space<smem>>, %arg3: memref<1x32x128xf32, #tpu.memory_space<vmem>>, %arg4: memref<16x128xf32, #tpu.memory_space<vmem>>, %arg5: memref<32x32xf32, #tpu.memory_space<vmem>>, %arg6: memref<32x1xf32, #tpu.memory_space<vmem>>, %arg7: memref<32x32xf32, #tpu.memory_space<vmem>>, %arg8: memref<32x1xf32, #tpu.memory_space<vmem>>, %arg9: memref<16x32xf32, #tpu.memory_space<vmem>>, %arg10: memref<16x1xf32, #tpu.memory_space<vmem>>, %arg11: memref<32x16xf32, #tpu.memory_space<vmem>>, %arg12: memref<32x1xf32, #tpu.memory_space<vmem>>, %arg13: memref<32x32xf32, #tpu.memory_space<vmem>>, %arg14: memref<32x1xf32, #tpu.memory_space<vmem>>, %arg15: memref<32x32xf32, #tpu.memory_space<vmem>>, %arg16: memref<32x1xf32, #tpu.memory_space<vmem>>, %arg17: memref<1x32x128xf32, #tpu.memory_space<vmem>>, %arg18: memref<1x16x128xf32, #tpu.memory_space<vmem>>) attributes {dimension_semantics = [#tpu.dimension_semantics<parallel>, #tpu.dimension_semantics<parallel>], iteration_bounds = array<i64: 2, 1>, scalar_prefetch = 1 : i64, scratch_operands = 0 : i64, tpu.core_type = #tpu.core_type<tc>, window_params = [{transform_indices = @transform_0, window_bounds = array<i64: 1, 32, 128>}, {transform_indices = @transform_1, window_bounds = array<i64: 16, 128>}, {pipeline_mode = #tpu.pipeline_mode<synchronous>, transform_indices = @transform_2, window_bounds = array<i64: 32, 32>}, {pipeline_mode = #tpu.pipeline_mode<synchronous>, transform_indices = @transform_3, window_bounds = array<i64: 32, 1>}, {pipeline_mode = #tpu.pipeline_mode<synchronous>, transform_indices = @transform_4, window_bounds = array<i64: 32, 32>}, {pipeline_mode = #tpu.pipeline_mode<synchronous>, transform_indices = @transform_5, window_bounds = array<i64: 32, 1>}, {pipeline_mode = #tpu.pipeline_mode<synchronous>, transform_indices = @transform_6, window_bounds = array<i64: 16, 32>}, {pipeline_mode = #tpu.pipeline_mode<synchronous>, transform_indices = @transform_7, window_bounds = array<i64: 16, 1>}, {pipeline_mode = #tpu.pipeline_mode<synchronous>, transform_indices = @transform_8, window_bounds = array<i64: 32, 16>}, {pipeline_mode = #tpu.pipeline_mode<synchronous>, transform_indices = @transform_9, window_bounds = array<i64: 32, 1>}, {pipeline_mode = #tpu.pipeline_mode<synchronous>, transform_indices = @transform_10, window_bounds = array<i64: 32, 32>}, {pipeline_mode = #tpu.pipeline_mode<synchronous>, transform_indices = @transform_11, window_bounds = array<i64: 32, 1>}, {pipeline_mode = #tpu.pipeline_mode<synchronous>, transform_indices = @transform_12, window_bounds = array<i64: 32, 32>}, {pipeline_mode = #tpu.pipeline_mode<synchronous>, transform_indices = @transform_13, window_bounds = array<i64: 32, 1>}, {transform_indices = @transform_14, window_bounds = array<i64: 1, 32, 128>}, {transform_indices = @transform_15, window_bounds = array<i64: 1, 16, 128>}]} {
    %c0 = arith.constant 0 : index
    %c0_0 = arith.constant 0 : index
    %c0_1 = arith.constant 0 : index
    %0 = vector.load %arg3[%c0, %c0_0, %c0_1] : memref<1x32x128xf32, #tpu.memory_space<vmem>>, vector<1x32x128xf32>
    %1 = vector.shape_cast %0 : vector<1x32x128xf32> to vector<32x128xf32>
    %c0_2 = arith.constant 0 : index
    %c0_3 = arith.constant 0 : index
    %2 = vector.load %arg5[%c0_2, %c0_3] : memref<32x32xf32, #tpu.memory_space<vmem>>, vector<32x32xf32>
    %cst = arith.constant dense<0.000000e+00> : vector<32x128xf32>
    %3 = tpu.matmul %2, %1, %cst {dimension_numbers = #tpu.dot_dimension_numbers<[1], [0], [0], [1], [0, 0, 1, 1], [], []>} : vector<32x32xf32>, vector<32x128xf32>, vector<32x128xf32> -> vector<32x128xf32>
    %c0_4 = arith.constant 0 : index
    %c0_5 = arith.constant 0 : index
    %4 = vector.load %arg6[%c0_4, %c0_5] : memref<32x1xf32, #tpu.memory_space<vmem>>, vector<32x1xf32>
    %5 = vector.broadcast %4 : vector<32x1xf32> to vector<32x128xf32>
    %6 = arith.addf %3, %5 : vector<32x128xf32>
    %cst_6 = arith.constant 0.000000e+00 : f32
    %7 = vector.broadcast %cst_6 : f32 to vector<32x128xf32>
    %8 = arith.maximumf %6, %7 : vector<32x128xf32>
    %c0_7 = arith.constant 0 : index
    %c0_8 = arith.constant 0 : index
    %9 = vector.load %arg7[%c0_7, %c0_8] : memref<32x32xf32, #tpu.memory_space<vmem>>, vector<32x32xf32>
    %cst_9 = arith.constant dense<0.000000e+00> : vector<32x128xf32>
    %10 = tpu.matmul %9, %8, %cst_9 {dimension_numbers = #tpu.dot_dimension_numbers<[1], [0], [0], [1], [0, 0, 1, 1], [], []>} : vector<32x32xf32>, vector<32x128xf32>, vector<32x128xf32> -> vector<32x128xf32>
    %c0_10 = arith.constant 0 : index
    %c0_11 = arith.constant 0 : index
    %11 = vector.load %arg8[%c0_10, %c0_11] : memref<32x1xf32, #tpu.memory_space<vmem>>, vector<32x1xf32>
    %12 = vector.broadcast %11 : vector<32x1xf32> to vector<32x128xf32>
    %13 = arith.addf %10, %12 : vector<32x128xf32>
    %cst_12 = arith.constant 0.000000e+00 : f32
    %14 = vector.broadcast %cst_12 : f32 to vector<32x128xf32>
    %15 = arith.maximumf %13, %14 : vector<32x128xf32>
    %c0_13 = arith.constant 0 : index
    %c0_14 = arith.constant 0 : index
    %16 = vector.load %arg9[%c0_13, %c0_14] : memref<16x32xf32, #tpu.memory_space<vmem>>, vector<16x32xf32>
    %cst_15 = arith.constant dense<0.000000e+00> : vector<16x128xf32>
    %17 = tpu.matmul %16, %15, %cst_15 {dimension_numbers = #tpu.dot_dimension_numbers<[1], [0], [0], [1], [0, 0, 1, 1], [], []>} : vector<16x32xf32>, vector<32x128xf32>, vector<16x128xf32> -> vector<16x128xf32>
    %c0_16 = arith.constant 0 : index
    %c0_17 = arith.constant 0 : index
    %18 = vector.load %arg10[%c0_16, %c0_17] : memref<16x1xf32, #tpu.memory_space<vmem>>, vector<16x1xf32>
    %19 = vector.broadcast %18 : vector<16x1xf32> to vector<16x128xf32>
    %20 = arith.addf %17, %19 : vector<16x128xf32>
    %c0_18 = arith.constant 0 : index
    %c0_19 = arith.constant 0 : index
    %c0_20 = arith.constant 0 : index
    %21 = vector.load %arg18[%c0_18, %c0_19, %c0_20] : memref<1x16x128xf32, #tpu.memory_space<vmem>>, vector<1x16x128xf32>
    %22 = vector.shape_cast %21 : vector<1x16x128xf32> to vector<16x128xf32>
    %23 = vector.shape_cast %20 : vector<16x128xf32> to vector<1x16x128xf32>
    tpu.vector_store %arg18[%c0_18, %c0_19, %c0_20], %23 {strides = array<i32>} : memref<1x16x128xf32, #tpu.memory_space<vmem>>, vector<1x16x128xf32>,
    %c0_21 = arith.constant 0 : index
    %c0_22 = arith.constant 0 : index
    %24 = vector.load %arg4[%c0_21, %c0_22] : memref<16x128xf32, #tpu.memory_space<vmem>>, vector<16x1xf32>
    %25 = vector.broadcast %24 : vector<16x1xf32> to vector<16x128xf32>
    %26 = arith.addf %20, %25 : vector<16x128xf32>
    %c0_23 = arith.constant 0 : index
    %c0_24 = arith.constant 0 : index
    %27 = vector.load %arg11[%c0_23, %c0_24] : memref<32x16xf32, #tpu.memory_space<vmem>>, vector<32x16xf32>
    %cst_25 = arith.constant dense<0.000000e+00> : vector<32x128xf32>
    %28 = tpu.matmul %27, %26, %cst_25 {dimension_numbers = #tpu.dot_dimension_numbers<[1], [0], [0], [1], [0, 0, 1, 1], [], []>} : vector<32x16xf32>, vector<16x128xf32>, vector<32x128xf32> -> vector<32x128xf32>
    %c0_26 = arith.constant 0 : index
    %c0_27 = arith.constant 0 : index
    %29 = vector.load %arg12[%c0_26, %c0_27] : memref<32x1xf32, #tpu.memory_space<vmem>>, vector<32x1xf32>
    %30 = vector.broadcast %29 : vector<32x1xf32> to vector<32x128xf32>
    %31 = arith.addf %28, %30 : vector<32x128xf32>
    %cst_28 = arith.constant 0.000000e+00 : f32
    %32 = vector.broadcast %cst_28 : f32 to vector<32x128xf32>
    %33 = arith.maximumf %31, %32 : vector<32x128xf32>
    %c0_29 = arith.constant 0 : index
    %c0_30 = arith.constant 0 : index
    %34 = vector.load %arg13[%c0_29, %c0_30] : memref<32x32xf32, #tpu.memory_space<vmem>>, vector<32x32xf32>
    %cst_31 = arith.constant dense<0.000000e+00> : vector<32x128xf32>
    %35 = tpu.matmul %34, %33, %cst_31 {dimension_numbers = #tpu.dot_dimension_numbers<[1], [0], [0], [1], [0, 0, 1, 1], [], []>} : vector<32x32xf32>, vector<32x128xf32>, vector<32x128xf32> -> vector<32x128xf32>
    %c0_32 = arith.constant 0 : index
    %c0_33 = arith.constant 0 : index
    %36 = vector.load %arg14[%c0_32, %c0_33] : memref<32x1xf32, #tpu.memory_space<vmem>>, vector<32x1xf32>
    %37 = vector.broadcast %36 : vector<32x1xf32> to vector<32x128xf32>
    %38 = arith.addf %35, %37 : vector<32x128xf32>
    %cst_34 = arith.constant 0.000000e+00 : f32
    %39 = vector.broadcast %cst_34 : f32 to vector<32x128xf32>
    %40 = arith.maximumf %38, %39 : vector<32x128xf32>
    %c0_35 = arith.constant 0 : index
    %c0_36 = arith.constant 0 : index
    %41 = vector.load %arg15[%c0_35, %c0_36] : memref<32x32xf32, #tpu.memory_space<vmem>>, vector<32x32xf32>
    %cst_37 = arith.constant dense<0.000000e+00> : vector<32x128xf32>
    %42 = tpu.matmul %41, %40, %cst_37 {dimension_numbers = #tpu.dot_dimension_numbers<[1], [0], [0], [1], [0, 0, 1, 1], [], []>} : vector<32x32xf32>, vector<32x128xf32>, vector<32x128xf32> -> vector<32x128xf32>
    %c0_38 = arith.constant 0 : index
    %c0_39 = arith.constant 0 : index
    %43 = vector.load %arg16[%c0_38, %c0_39] : memref<32x1xf32, #tpu.memory_space<vmem>>, vector<32x1xf32>
    %44 = vector.broadcast %43 : vector<32x1xf32> to vector<32x128xf32>
    %45 = arith.addf %42, %44 : vector<32x128xf32>
    %c0_40 = arith.constant 0 : index
    %c0_41 = arith.constant 0 : index
    %c0_42 = arith.constant 0 : index
    %46 = vector.load %arg17[%c0_40, %c0_41, %c0_42] : memref<1x32x128xf32, #tpu.memory_space<vmem>>, vector<1x32x128xf32>
    %47 = vector.shape_cast %46 : vector<1x32x128xf32> to vector<32x128xf32>
    %48 = vector.shape_cast %45 : vector<32x128xf32> to vector<1x32x128xf32>
    tpu.vector_store %arg17[%c0_40, %c0_41, %c0_42], %48 {strides = array<i32>} : memref<1x32x128xf32, #tpu.memory_space<vmem>>, vector<1x32x128xf32>,
    return
  }
  func.func @transform_0(%arg0: i32, %arg1: i32, %arg2: memref<2xi32, #tpu.memory_space<smem>>) -> (i32, i32, i32) {
    %c0_i32 = arith.constant 0 : i32
    %c0_i32_0 = arith.constant 0 : i32
    return %arg0, %c0_i32, %arg1 : i32, i32, i32
  }
  func.func @transform_1(%arg0: i32, %arg1: i32, %arg2: memref<2xi32, #tpu.memory_space<smem>>) -> (i32, i32) {
    %0 = arith.index_cast %arg0 : i32 to index
    %1 = memref.load %arg2[%0] : memref<2xi32, #tpu.memory_space<smem>>
    %c0_i32 = arith.constant 0 : i32
    %c0_i32_0 = arith.constant 0 : i32
    return %c0_i32, %1 : i32, i32
  }
  func.func @transform_2(%arg0: i32, %arg1: i32, %arg2: memref<2xi32, #tpu.memory_space<smem>>) -> (i32, i32) {
    %c0_i32 = arith.constant 0 : i32
    %c0_i32_0 = arith.constant 0 : i32
    %c0_i32_1 = arith.constant 0 : i32
    return %c0_i32, %c0_i32_0 : i32, i32
  }
  func.func @transform_3(%arg0: i32, %arg1: i32, %arg2: memref<2xi32, #tpu.memory_space<smem>>) -> (i32, i32) {
    %c0_i32 = arith.constant 0 : i32
    %c0_i32_0 = arith.constant 0 : i32
    %c0_i32_1 = arith.constant 0 : i32
    return %c0_i32, %c0_i32_0 : i32, i32
  }
  func.func @transform_4(%arg0: i32, %arg1: i32, %arg2: memref<2xi32, #tpu.memory_space<smem>>) -> (i32, i32) {
    %c0_i32 = arith.constant 0 : i32
    %c0_i32_0 = arith.constant 0 : i32
    %c0_i32_1 = arith.constant 0 : i32
    return %c0_i32, %c0_i32_0 : i32, i32
  }
  func.func @transform_5(%arg0: i32, %arg1: i32, %arg2: memref<2xi32, #tpu.memory_space<smem>>) -> (i32, i32) {
    %c0_i32 = arith.constant 0 : i32
    %c0_i32_0 = arith.constant 0 : i32
    %c0_i32_1 = arith.constant 0 : i32
    return %c0_i32, %c0_i32_0 : i32, i32
  }
  func.func @transform_6(%arg0: i32, %arg1: i32, %arg2: memref<2xi32, #tpu.memory_space<smem>>) -> (i32, i32) {
    %c0_i32 = arith.constant 0 : i32
    %c0_i32_0 = arith.constant 0 : i32
    %c0_i32_1 = arith.constant 0 : i32
    return %c0_i32, %c0_i32_0 : i32, i32
  }
  func.func @transform_7(%arg0: i32, %arg1: i32, %arg2: memref<2xi32, #tpu.memory_space<smem>>) -> (i32, i32) {
    %c0_i32 = arith.constant 0 : i32
    %c0_i32_0 = arith.constant 0 : i32
    %c0_i32_1 = arith.constant 0 : i32
    return %c0_i32, %c0_i32_0 : i32, i32
  }
  func.func @transform_8(%arg0: i32, %arg1: i32, %arg2: memref<2xi32, #tpu.memory_space<smem>>) -> (i32, i32) {
    %c0_i32 = arith.constant 0 : i32
    %c0_i32_0 = arith.constant 0 : i32
    %c0_i32_1 = arith.constant 0 : i32
    return %c0_i32, %c0_i32_0 : i32, i32
  }
  func.func @transform_9(%arg0: i32, %arg1: i32, %arg2: memref<2xi32, #tpu.memory_space<smem>>) -> (i32, i32) {
    %c0_i32 = arith.constant 0 : i32
    %c0_i32_0 = arith.constant 0 : i32
    %c0_i32_1 = arith.constant 0 : i32
    return %c0_i32, %c0_i32_0 : i32, i32
  }
  func.func @transform_10(%arg0: i32, %arg1: i32, %arg2: memref<2xi32, #tpu.memory_space<smem>>) -> (i32, i32) {
    %c0_i32 = arith.constant 0 : i32
    %c0_i32_0 = arith.constant 0 : i32
    %c0_i32_1 = arith.constant 0 : i32
    return %c0_i32, %c0_i32_0 : i32, i32
  }
  func.func @transform_11(%arg0: i32, %arg1: i32, %arg2: memref<2xi32, #tpu.memory_space<smem>>) -> (i32, i32) {
    %c0_i32 = arith.constant 0 : i32
    %c0_i32_0 = arith.constant 0 : i32
    %c0_i32_1 = arith.constant 0 : i32
    return %c0_i32, %c0_i32_0 : i32, i32
  }
  func.func @transform_12(%arg0: i32, %arg1: i32, %arg2: memref<2xi32, #tpu.memory_space<smem>>) -> (i32, i32) {
    %c0_i32 = arith.constant 0 : i32
    %c0_i32_0 = arith.constant 0 : i32
    %c0_i32_1 = arith.constant 0 : i32
    return %c0_i32, %c0_i32_0 : i32, i32
  }
  func.func @transform_13(%arg0: i32, %arg1: i32, %arg2: memref<2xi32, #tpu.memory_space<smem>>) -> (i32, i32) {
    %c0_i32 = arith.constant 0 : i32
    %c0_i32_0 = arith.constant 0 : i32
    %c0_i32_1 = arith.constant 0 : i32
    return %c0_i32, %c0_i32_0 : i32, i32
  }
  func.func @transform_14(%arg0: i32, %arg1: i32, %arg2: memref<2xi32, #tpu.memory_space<smem>>) -> (i32, i32, i32) {
    %c0_i32 = arith.constant 0 : i32
    %c0_i32_0 = arith.constant 0 : i32
    return %arg0, %c0_i32, %arg1 : i32, i32, i32
  }
  func.func @transform_15(%arg0: i32, %arg1: i32, %arg2: memref<2xi32, #tpu.memory_space<smem>>) -> (i32, i32, i32) {
    %c0_i32 = arith.constant 0 : i32
    %c0_i32_0 = arith.constant 0 : i32
    return %arg0, %c0_i32, %arg1 : i32, i32, i32
  }
}

</mosaic_0001>

<llo_original>
// kernel: daud_v2_forward.1
$region0: #{daud_v2_forward.1}
  #allocation0 [shape = 'u32[]', space=smem, size = 0x4, offset = 0x4, fixed_abs, tag = 'smem constant byte address 0x4 - core index']
  #allocation1 [shape = 'u32[144,128]{1,0:T(1,128)}', space=vmem, size = 0x12000, scoped, tag = 'internal scratch']
  #allocation2 [shape = 's32[1]{0}', space=sflag, size = 0x4, scoped, tag = 'scoped memory for daud_v2_forward.1']
  #allocation3 [shape = 'u8[512]{0}', space=smem, size = 0x200, scoped, tag = 'prefetched SMEM operand 0']
  %s0 = inlined_call_operand.vmem [shape: s32[2], index: 0, kind: input, shape index: {}]
  %s1 = inlined_call_operand.vmem [shape: f32[2,32,128], index: 1, kind: input, shape index: {}]
  %s2 = inlined_call_operand.vmem [shape: f32[16,384], index: 2, kind: input, shape index: {}]
  %s3 = inlined_call_operand.vmem [shape: f32[32,32], index: 3, kind: input, shape index: {}]
  %s4 = inlined_call_operand.vmem [shape: f32[32,1], index: 4, kind: input, shape index: {}]
  %s5 = inlined_call_operand.vmem [shape: f32[32,32], index: 5, kind: input, shape index: {}]
  %s6 = inlined_call_operand.vmem [shape: f32[32,1], index: 6, kind: input, shape index: {}]
  %s7 = inlined_call_operand.vmem [shape: f32[16,32], index: 7, kind: input, shape index: {}]
  %s8 = inlined_call_operand.vmem [shape: f32[16,1], index: 8, kind: input, shape index: {}]
  %s9 = inlined_call_operand.vmem [shape: f32[32,16], index: 9, kind: input, shape index: {}]
  %s10 = inlined_call_operand.vmem [shape: f32[32,1], index: 10, kind: input, shape index: {}]
  %s11 = inlined_call_operand.vmem [shape: f32[32,32], index: 11, kind: input, shape index: {}]
  %s12 = inlined_call_operand.vmem [shape: f32[32,1], index: 12, kind: input, shape index: {}]
  %s13 = inlined_call_operand.vmem [shape: f32[32,32], index: 13, kind: input, shape index: {}]
  %s14 = inlined_call_operand.vmem [shape: f32[32,1], index: 14, kind: input, shape index: {}]
  %s15 = inlined_call_operand.vmem [shape: f32[2,32,128], index: 15, kind: output, shape index: {0}]
  %s16 = inlined_call_operand.vmem [shape: f32[2,16,128], index: 16, kind: output, shape index: {1}]
  %17 = xla_tuple %s15, %s16
  %s18 = sld [smem:[#allocation0]]
  $region135: #{daud_v2_forward.1} parent=0
    _
  %s20 = ssub.s32 1, %s18
  %s21 = scalar_select 0, %s20, %s18
  %s22 = sshll.u32 %s0, 4
  %s23 = int_to_ptr.vmem [resolvable:$true] %s22
  %25 = dma.vmem_to_smem %s23, 16, [#allocation3], [#allocation2]
  %26 = dma.done [#allocation2], 16
  %27 = sfence
  $region1: #{daud_v2_forward.1} parent=0
    #allocation4 [shape = 'u8[16384]{0}', space=vmem, size = 0x4000, scoped, tag = 'input window, operand 2']
    loop: start=0, step=1, limit=4
    $region2: #{daud_v2_forward.1} parent=1 // loop_pre_header
      _
    $region3: #{daud_v2_forward.1} parent=1 // loop_header
      %s29 = sphi 0, %s33
      %p30 = scmp.ge.s32.totalorder %s29, 4
      %s36 = sphi 0, %s48
      %s37 = sphi 0, %s44
      %s38 = sphi 0, %s36
      %s39 = sphi 0, %s37
      %s40 = sphi 0, %s38
      %s41 = sphi 0, %s39
      %s53 = sphi 0, %s55
      %s56 = sphi 0, %s53
      %s57 = sphi 0, %s56
      %s73 = sphi 0, %s57
      %s81 = sphi 0, %s83
      %s84 = sphi 0, %s81
      %s85 = sphi 0, %s84
      %s101 = sphi 0, %s85
      %s105 = sphi 0, %s105
      %s107 = sphi 0, %s105
      %s108 = sphi 0, %s107
      %s122 = sphi 0, %s108
      %s126 = sphi 0, %s126
      %s128 = sphi 0, %s126
      %s129 = sphi 0, %s128
      %s143 = sphi 0, %s129
      %s147 = sphi 0, %s147
      %s149 = sphi 0, %s147
      %s150 = sphi 0, %s149
      %s164 = sphi 0, %s150
      %s168 = sphi 0, %s168
      %s170 = sphi 0, %s168
      %s171 = sphi 0, %s170
      %s185 = sphi 0, %s171
      %s189 = sphi 0, %s189
      %s191 = sphi 0, %s189
      %s192 = sphi 0, %s191
      %s206 = sphi 0, %s192
      %s210 = sphi 0, %s210
      %s212 = sphi 0, %s210
      %s213 = sphi 0, %s212
      %s227 = sphi 0, %s213
      %s231 = sphi 0, %s231
      %s233 = sphi 0, %s231
      %s234 = sphi 0, %s233
      %s248 = sphi 0, %s234
      %s252 = sphi 0, %s252
      %s254 = sphi 0, %s252
      %s255 = sphi 0, %s254
      %s269 = sphi 0, %s255
      %s273 = sphi 0, %s273
      %s275 = sphi 0, %s273
      %s276 = sphi 0, %s275
      %s290 = sphi 0, %s276
      %s294 = sphi 0, %s294
      %s296 = sphi 0, %s294
      %s297 = sphi 0, %s296
      %s311 = sphi 0, %s297
      %s315 = sphi 0, %s315
      %s317 = sphi 0, %s315
      %s318 = sphi 0, %s317
      %s332 = sphi 0, %s318
      %s336 = sphi 0, %s336
      %s338 = sphi 0, %s336
      %s339 = sphi 0, %s338
      %s353 = sphi 0, %s339
      %s361 = sphi 0, %s363
      %s364 = sphi 0, %s361
      %s365 = sphi 0, %s364
      %s381 = sphi 0, %s365
      %s389 = sphi 0, %s391
      %s392 = sphi 0, %s389
      %s393 = sphi 0, %s392
      %s409 = sphi 0, %s393
    $region4: #{daud_v2_forward.1} parent=1 // loop_header_branch
      %32 = sbr.rel (%p30) target = $region8
    $region5: #{daud_v2_forward.1} parent=1 // loop_body
      %s34 = ssub.s32 %s29, 1
      %s35 = ssub.s32 %s29, 2
      %s42 = sadd.s32 1, %s37
      %p43 = scmp.ge.s32.totalorder %s42, 1
      %s44 = scalar_select %p43, 0, %s42
      %s45 = sadd.s32 1, %s36
      %s46 = scalar_select %p43, %s45, %s36
      %p47 = scmp.ge.s32.totalorder %s46, 2
      %s48 = scalar_select %p47, 0, %s46
      %s49 = ssub.s32 %s36, %s48
      %s50 = ssub.s32 %s37, %s44
      %s51 = sor.u32 %s49, %s50
      %p52 = scmp.eq.s32.totalorder %s51, 0
      %s54 = sadd.s32 %s53, 1
      %s55 = scalar_select %p52, %s53, %s54
      %p58 = pneg %p52
      %p59 = scmp.eq.s32.totalorder %s29, 1
      %p60 = por %p58, %p59
      %p61 = scmp.ne.s32.totalorder %s53, %s56
      %p62 = scmp.eq.s32.totalorder %s29, 0
      %p63 = por %p61, %p62
      %p64 = scmp.ne.s32.totalorder %s53, %s56
      %p65 = scmp.eq.s32.totalorder %s34, 1
      %p66 = por %p64, %p65
      %p67 = scmp.ne.s32.totalorder %s56, %s57
      %p68 = scmp.eq.s32.totalorder %s34, 0
      %p69 = por %p67, %p68
      %p70 = scmp.ne.s32.totalorder %s56, %s57
      %p71 = scmp.eq.s32.totalorder %s35, 1
      %p72 = por %p70, %p71
      %p74 = scmp.ne.s32.totalorder %s57, %s73
      %p75 = scmp.eq.s32.totalorder %s35, 0
      %p76 = por %p74, %p75
      %s77 = sld [smem:[#allocation3 + %s36]]
      %s78 = sld [smem:[#allocation3 + %s48]]
      %s79 = ssub.s32 %s77, %s78
      %p80 = scmp.eq.s32.totalorder %s79, 0
      %s82 = sadd.s32 %s81, 1
      %s83 = scalar_select %p80, %s81, %s82
      %p86 = pneg %p80
      %p87 = scmp.eq.s32.totalorder %s29, 1
      %p88 = por %p86, %p87
      %p89 = scmp.ne.s32.totalorder %s81, %s84
      %p90 = scmp.eq.s32.totalorder %s29, 0
      %p91 = por %p89, %p90
      %p92 = scmp.ne.s32.totalorder %s81, %s84
      %p93 = scmp.eq.s32.totalorder %s34, 1
      %p94 = por %p92, %p93
      %p95 = scmp.ne.s32.totalorder %s84, %s85
      %p96 = scmp.eq.s32.totalorder %s34, 0
      %p97 = por %p95, %p96
      %p98 = scmp.ne.s32.totalorder %s84, %s85
      %p99 = scmp.eq.s32.totalorder %s35, 1
      %p100 = por %p98, %p99
      %p102 = scmp.ne.s32.totalorder %s85, %s101
      %p103 = scmp.eq.s32.totalorder %s35, 0
      %p104 = por %p102, %p103
      %s106 = sadd.s32 %s105, 1
      %p109 = scmp.eq.s32.totalorder %s29, 1
      %p110 = scmp.ne.s32.totalorder %s105, %s107
      %p111 = scmp.eq.s32.totalorder %s29, 0
      %p112 = por %p110, %p111
      %p113 = scmp.ne.s32.totalorder %s105, %s107
      %p114 = scmp.eq.s32.totalorder %s34, 1
      %p115 = por %p113, %p114
      %p116 = scmp.ne.s32.totalorder %s107, %s108
      %p117 = scmp.eq.s32.totalorder %s34, 0
      %p118 = por %p116, %p117
      %p119 = scmp.ne.s32.totalorder %s107, %s108
      %p120 = scmp.eq.s32.totalorder %s35, 1
      %p121 = por %p119, %p120
      %p123 = scmp.ne.s32.totalorder %s108, %s122
      %p124 = scmp.eq.s32.totalorder %s35, 0
      %p125 = por %p123, %p124
      %s127 = sadd.s32 %s126, 1
      %p130 = scmp.eq.s32.totalorder %s29, 1
      %p131 = scmp.ne.s32.totalorder %s126, %s128
      %p132 = scmp.eq.s32.totalorder %s29, 0
      %p133 = por %p131, %p132
      %p134 = scmp.ne.s32.totalorder %s126, %s128
      %p135 = scmp.eq.s32.totalorder %s34, 1
      %p136 = por %p134, %p135
      %p137 = scmp.ne.s32.totalorder %s128, %s129
      %p138 = scmp.eq.s32.totalorder %s34, 0
      %p139 = por %p137, %p138
      %p140 = scmp.ne.s32.totalorder %s128, %s129
      %p141 = scmp.eq.s32.totalorder %s35, 1
      %p142 = por %p140, %p141
      %p144 = scmp.ne.s32.totalorder %s129, %s143
      %p145 = scmp.eq.s32.totalorder %s35, 0
      %p146 = por %p144, %p145
      %s148 = sadd.s32 %s147, 1
      %p151 = scmp.eq.s32.totalorder %s29, 1
      %p152 = scmp.ne.s32.totalorder %s147, %s149
      %p153 = scmp.eq.s32.totalorder %s29, 0
      %p154 = por %p152, %p153
      %p155 = scmp.ne.s32.totalorder %s147, %s149
      %p156 = scmp.eq.s32.totalorder %s34, 1
      %p157 = por %p155, %p156
      %p158 = scmp.ne.s32.totalorder %s149, %s150
      %p159 = scmp.eq.s32.totalorder %s34, 0
      %p160 = por %p158, %p159
      %p161 = scmp.ne.s32.totalorder %s149, %s150
      %p162 = scmp.eq.s32.totalorder %s35, 1
      %p163 = por %p161, %p162
      %p165 = scmp.ne.s32.totalorder %s150, %s164
      %p166 = scmp.eq.s32.totalorder %s35, 0
      %p167 = por %p165, %p166
      %s169 = sadd.s32 %s168, 1
      %p172 = scmp.eq.s32.totalorder %s29, 1
      %p173 = scmp.ne.s32.totalorder %s168, %s170
      %p174 = scmp.eq.s32.totalorder %s29, 0
      %p175 = por %p173, %p174
      %p176 = scmp.ne.s32.totalorder %s168, %s170
      %p177 = scmp.eq.s32.totalorder %s34, 1
      %p178 = por %p176, %p177
      %p179 = scmp.ne.s32.totalorder %s170, %s171
      %p180 = scmp.eq.s32.totalorder %s34, 0
      %p181 = por %p179, %p180
      %p182 = scmp.ne.s32.totalorder %s170, %s171
      %p183 = scmp.eq.s32.totalorder %s35, 1
      %p184 = por %p182, %p183
      %p186 = scmp.ne.s32.totalorder %s171, %s185
      %p187 = scmp.eq.s32.totalorder %s35, 0
      %p188 = por %p186, %p187
      %s190 = sadd.s32 %s189, 1
      %p193 = scmp.eq.s32.totalorder %s29, 1
      %p194 = scmp.ne.s32.totalorder %s189, %s191
      %p195 = scmp.eq.s32.totalorder %s29, 0
      %p196 = por %p194, %p195
      %p197 = scmp.ne.s32.totalorder %s189, %s191
      %p198 = scmp.eq.s32.totalorder %s34, 1
      %p199 = por %p197, %p198
      %p200 = scmp.ne.s32.totalorder %s191, %s192
      %p201 = scmp.eq.s32.totalorder %s34, 0
      %p202 = por %p200, %p201
      %p203 = scmp.ne.s32.totalorder %s191, %s192
      %p204 = scmp.eq.s32.totalorder %s35, 1
      %p205 = por %p203, %p204
      %p207 = scmp.ne.s32.totalorder %s192, %s206
      %p208 = scmp.eq.s32.totalorder %s35, 0
      %p209 = por %p207, %p208
      %s211 = sadd.s32 %s210, 1
      %p214 = scmp.eq.s32.totalorder %s29, 1
      %p215 = scmp.ne.s32.totalorder %s210, %s212
      %p216 = scmp.eq.s32.totalorder %s29, 0
      %p217 = por %p215, %p216
      %p218 = scmp.ne.s32.totalorder %s210, %s212
      %p219 = scmp.eq.s32.totalorder %s34, 1
      %p220 = por %p218, %p219
      %p221 = scmp.ne.s32.totalorder %s212, %s213
      %p222 = scmp.eq.s32.totalorder %s34, 0
      %p223 = por %p221, %p222
      %p224 = scmp.ne.s32.totalorder %s212, %s213
      %p225 = scmp.eq.s32.totalorder %s35, 1
      %p226 = por %p224, %p225
      %p228 = scmp.ne.s32.totalorder %s213, %s227
      %p229 = scmp.eq.s32.totalorder %s35, 0
      %p230 = por %p228, %p229
      %s232 = sadd.s32 %s231, 1
      %p235 = scmp.eq.s32.totalorder %s29, 1
      %p236 = scmp.ne.s32.totalorder %s231, %s233
      %p237 = scmp.eq.s32.totalorder %s29, 0
      %p238 = por %p236, %p237
      %p239 = scmp.ne.s32.totalorder %s231, %s233
      %p240 = scmp.eq.s32.totalorder %s34, 1
      %p241 = por %p239, %p240
      %p242 = scmp.ne.s32.totalorder %s233, %s234
      %p243 = scmp.eq.s32.totalorder %s34, 0
      %p244 = por %p242, %p243
      %p245 = scmp.ne.s32.totalorder %s233, %s234
      %p246 = scmp.eq.s32.totalorder %s35, 1
      %p247 = por %p245, %p246
      %p249 = scmp.ne.s32.totalorder %s234, %s248
      %p250 = scmp.eq.s32.totalorder %s35, 0
      %p251 = por %p249, %p250
      %s253 = sadd.s32 %s252, 1
      %p256 = scmp.eq.s32.totalorder %s29, 1
      %p257 = scmp.ne.s32.totalorder %s252, %s254
      %p258 = scmp.eq.s32.totalorder %s29, 0
      %p259 = por %p257, %p258
      %p260 = scmp.ne.s32.totalorder %s252, %s254
      %p261 = scmp.eq.s32.totalorder %s34, 1
      %p262 = por %p260, %p261
      %p263 = scmp.ne.s32.totalorder %s254, %s255
      %p264 = scmp.eq.s32.totalorder %s34, 0
      %p265 = por %p263, %p264
      %p266 = scmp.ne.s32.totalorder %s254, %s255
      %p267 = scmp.eq.s32.totalorder %s35, 1
      %p268 = por %p266, %p267
      %p270 = scmp.ne.s32.totalorder %s255, %s269
      %p271 = scmp.eq.s32.totalorder %s35, 0
      %p272 = por %p270, %p271
      %s274 = sadd.s32 %s273, 1
      %p277 = scmp.eq.s32.totalorder %s29, 1
      %p278 = scmp.ne.s32.totalorder %s273, %s275
      %p279 = scmp.eq.s32.totalorder %s29, 0
      %p280 = por %p278, %p279
      %p281 = scmp.ne.s32.totalorder %s273, %s275
      %p282 = scmp.eq.s32.totalorder %s34, 1
      %p283 = por %p281, %p282
      %p284 = scmp.ne.s32.totalorder %s275, %s276
      %p285 = scmp.eq.s32.totalorder %s34, 0
      %p286 = por %p284, %p285
      %p287 = scmp.ne.s32.totalorder %s275, %s276
      %p288 = scmp.eq.s32.totalorder %s35, 1
      %p289 = por %p287, %p288
      %p291 = scmp.ne.s32.totalorder %s276, %s290
      %p292 = scmp.eq.s32.totalorder %s35, 0
      %p293 = por %p291, %p292
      %s295 = sadd.s32 %s294, 1
      %p298 = scmp.eq.s32.totalorder %s29, 1
      %p299 = scmp.ne.s32.totalorder %s294, %s296
      %p300 = scmp.eq.s32.totalorder %s29, 0
      %p301 = por %p299, %p300
      %p302 = scmp.ne.s32.totalorder %s294, %s296
      %p303 = scmp.eq.s32.totalorder %s34, 1
      %p304 = por %p302, %p303
      %p305 = scmp.ne.s32.totalorder %s296, %s297
      %p306 = scmp.eq.s32.totalorder %s34, 0
      %p307 = por %p305, %p306
      %p308 = scmp.ne.s32.totalorder %s296, %s297
      %p309 = scmp.eq.s32.totalorder %s35, 1
      %p310 = por %p308, %p309
      %p312 = scmp.ne.s32.totalorder %s297, %s311
      %p313 = scmp.eq.s32.totalorder %s35, 0
      %p314 = por %p312, %p313
      %s316 = sadd.s32 %s315, 1
      %p319 = scmp.eq.s32.totalorder %s29, 1
      %p320 = scmp.ne.s32.totalorder %s315, %s317
      %p321 = scmp.eq.s32.totalorder %s29, 0
      %p322 = por %p320, %p321
      %p323 = scmp.ne.s32.totalorder %s315, %s317
      %p324 = scmp.eq.s32.totalorder %s34, 1
      %p325 = por %p323, %p324
      %p326 = scmp.ne.s32.totalorder %s317, %s318
      %p327 = scmp.eq.s32.totalorder %s34, 0
      %p328 = por %p326, %p327
      %p329 = scmp.ne.s32.totalorder %s317, %s318
      %p330 = scmp.eq.s32.totalorder %s35, 1
      %p331 = por %p329, %p330
      %p333 = scmp.ne.s32.totalorder %s318, %s332
      %p334 = scmp.eq.s32.totalorder %s35, 0
      %p335 = por %p333, %p334
      %s337 = sadd.s32 %s336, 1
      %p340 = scmp.eq.s32.totalorder %s29, 1
      %p341 = scmp.ne.s32.totalorder %s336, %s338
      %p342 = scmp.eq.s32.totalorder %s29, 0
      %p343 = por %p341, %p342
      %p344 = scmp.ne.s32.totalorder %s336, %s338
      %p345 = scmp.eq.s32.totalorder %s34, 1
      %p346 = por %p344, %p345
      %p347 = scmp.ne.s32.totalorder %s338, %s339
      %p348 = scmp.eq.s32.totalorder %s34, 0
      %p349 = por %p347, %p348
      %p350 = scmp.ne.s32.totalorder %s338, %s339
      %p351 = scmp.eq.s32.totalorder %s35, 1
      %p352 = por %p350, %p351
      %p354 = scmp.ne.s32.totalorder %s339, %s353
      %p355 = scmp.eq.s32.totalorder %s35, 0
      %p356 = por %p354, %p355
      %s357 = ssub.s32 %s36, %s48
      %s358 = ssub.s32 %s37, %s44
      %s359 = sor.u32 %s357, %s358
      %p360 = scmp.eq.s32.totalorder %s359, 0
      %s362 = sadd.s32 %s361, 1
      %s363 = scalar_select %p360, %s361, %s362
      %p366 = pneg %p360
      %p367 = scmp.eq.s32.totalorder %s29, 1
      %p368 = por %p366, %p367
      %p369 = scmp.ne.s32.totalorder %s361, %s364
      %p370 = scmp.eq.s32.totalorder %s29, 0
      %p371 = por %p369, %p370
      %p372 = scmp.ne.s32.totalorder %s361, %s364
      %p373 = scmp.eq.s32.totalorder %s34, 1
      %p374 = por %p372, %p373
      %p375 = scmp.ne.s32.totalorder %s364, %s365
      %p376 = scmp.eq.s32.totalorder %s34, 0
      %p377 = por %p375, %p376
      %p378 = scmp.ne.s32.totalorder %s364, %s365
      %p379 = scmp.eq.s32.totalorder %s35, 1
      %p380 = por %p378, %p379
      %p382 = scmp.ne.s32.totalorder %s365, %s381
      %p383 = scmp.eq.s32.totalorder %s35, 0
      %p384 = por %p382, %p383
      %s385 = ssub.s32 %s36, %s48
      %s386 = ssub.s32 %s37, %s44
      %s387 = sor.u32 %s385, %s386
      %p388 = scmp.eq.s32.totalorder %s387, 0
      %s390 = sadd.s32 %s389, 1
      %s391 = scalar_select %p388, %s389, %s390
      %p394 = pneg %p388
      %p395 = scmp.eq.s32.totalorder %s29, 1
      %p396 = por %p394, %p395
      %p397 = scmp.ne.s32.totalorder %s389, %s392
      %p398 = scmp.eq.s32.totalorder %s29, 0
      %p399 = por %p397, %p398
      %p400 = scmp.ne.s32.totalorder %s389, %s392
      %p401 = scmp.eq.s32.totalorder %s34, 1
      %p402 = por %p400, %p401
      %p403 = scmp.ne.s32.totalorder %s392, %s393
      %p404 = scmp.eq.s32.totalorder %s34, 0
      %p405 = por %p403, %p404
      %p406 = scmp.ne.s32.totalorder %s392, %s393
      %p407 = scmp.eq.s32.totalorder %s35, 1
      %p408 = por %p406, %p407
      %p410 = scmp.ne.s32.totalorder %s393, %s409
      %p411 = scmp.eq.s32.totalorder %s35, 0
      %p412 = por %p410, %p411
      %p413 = scmp.le.s32.totalorder 1, %s29
      %p414 = scmp.lt.s32.totalorder %s29, 3
      %p415 = pnand %p413, %p414
      %p416 = pneg %p415
      // Predicated region
      $region9: #{daud_v2_forward.1} parent=5 // pred_check
        _
      $region10: #{daud_v2_forward.1} parent=5 // pred_check_branch
        %418 = sbr.rel (%p415) target = $region12
      $region11: #{daud_v2_forward.1} parent=5 // pred_region
        %s419 = ssub.s32 %s29, 1
        // Predicated region
        $region13: #{daud_v2_forward.1} parent=11 // pred_check
          %p420 = pneg %p118
        $region14: #{daud_v2_forward.1} parent=11 // pred_check_branch
          %422 = sbr.rel (%p420) target = $region16
        $region15: #{daud_v2_forward.1} parent=11 // pred_region
          _
        $region16: #{daud_v2_forward.1} parent=11 // pred_fallthru
          _
        // Predicated region
        $region17: #{daud_v2_forward.1} parent=11 // pred_check
          %p423 = pneg %p139
        $region18: #{daud_v2_forward.1} parent=11 // pred_check_branch
          %425 = sbr.rel (%p423) target = $region20
        $region19: #{daud_v2_forward.1} parent=11 // pred_region
          _
        $region20: #{daud_v2_forward.1} parent=11 // pred_fallthru
          _
        // Predicated region
        $region21: #{daud_v2_forward.1} parent=11 // pred_check
          %p426 = pneg %p160
        $region22: #{daud_v2_forward.1} parent=11 // pred_check_branch
          %428 = sbr.rel (%p426) target = $region24
        $region23: #{daud_v2_forward.1} parent=11 // pred_region
          _
        $region24: #{daud_v2_forward.1} parent=11 // pred_fallthru
          _
        // Predicated region
        $region25: #{daud_v2_forward.1} parent=11 // pred_check
          %p429 = pneg %p181
        $region26: #{daud_v2_forward.1} parent=11 // pred_check_branch
          %431 = sbr.rel (%p429) target = $region28
        $region27: #{daud_v2_forward.1} parent=11 // pred_region
          _
        $region28: #{daud_v2_forward.1} parent=11 // pred_fallthru
          _
        // Predicated region
        $region29: #{daud_v2_forward.1} parent=11 // pred_check
          %p432 = pneg %p202
        $region30: #{daud_v2_forward.1} parent=11 // pred_check_branch
          %434 = sbr.rel (%p432) target = $region32
        $region31: #{daud_v2_forward.1} parent=11 // pred_region
          _
        $region32: #{daud_v2_forward.1} parent=11 // pred_fallthru
          _
        // Predicated region
        $region33: #{daud_v2_forward.1} parent=11 // pred_check
          %p435 = pneg %p223
        $region34: #{daud_v2_forward.1} parent=11 // pred_check_branch
          %437 = sbr.rel (%p435) target = $region36
        $region35: #{daud_v2_forward.1} parent=11 // pred_region
          _
        $region36: #{daud_v2_forward.1} parent=11 // pred_fallthru
          _
        // Predicated region
        $region37: #{daud_v2_forward.1} parent=11 // pred_check
          %p438 = pneg %p244
        $region38: #{daud_v2_forward.1} parent=11 // pred_check_branch
          %440 = sbr.rel (%p438) target = $region40
        $region39: #{daud_v2_forward.1} parent=11 // pred_region
          _
        $region40: #{daud_v2_forward.1} parent=11 // pred_fallthru
          _
        // Predicated region
        $region41: #{daud_v2_forward.1} parent=11 // pred_check
          %p441 = pneg %p265
        $region42: #{daud_v2_forward.1} parent=11 // pred_check_branch
          %443 = sbr.rel (%p441) target = $region44
        $region43: #{daud_v2_forward.1} parent=11 // pred_region
          _
        $region44: #{daud_v2_forward.1} parent=11 // pred_fallthru
          _
        // Predicated region
        $region45: #{daud_v2_forward.1} parent=11 // pred_check
          %p444 = pneg %p286
        $region46: #{daud_v2_forward.1} parent=11 // pred_check_branch
          %446 = sbr.rel (%p444) target = $region48
        $region47: #{daud_v2_forward.1} parent=11 // pred_region
          _
        $region48: #{daud_v2_forward.1} parent=11 // pred_fallthru
          _
        // Predicated region
        $region49: #{daud_v2_forward.1} parent=11 // pred_check
          %p447 = pneg %p307
        $region50: #{daud_v2_forward.1} parent=11 // pred_check_branch
          %449 = sbr.rel (%p447) target = $region52
        $region51: #{daud_v2_forward.1} parent=11 // pred_region
          _
        $region52: #{daud_v2_forward.1} parent=11 // pred_fallthru
          _
        // Predicated region
        $region53: #{daud_v2_forward.1} parent=11 // pred_check
          %p450 = pneg %p328
        $region54: #{daud_v2_forward.1} parent=11 // pred_check_branch
          %452 = sbr.rel (%p450) target = $region56
        $region55: #{daud_v2_forward.1} parent=11 // pred_region
          _
        $region56: #{daud_v2_forward.1} parent=11 // pred_fallthru
          _
        // Predicated region
        $region57: #{daud_v2_forward.1} parent=11 // pred_check
          %p453 = pneg %p349
        $region58: #{daud_v2_forward.1} parent=11 // pred_check_branch
          %455 = sbr.rel (%p453) target = $region60
        $region59: #{daud_v2_forward.1} parent=11 // pred_region
          _
        $region60: #{daud_v2_forward.1} parent=11 // pred_fallthru
          _
      $region12: #{daud_v2_forward.1} parent=5 // pred_fallthru
        _
      %p456 = scmp.lt.s32.totalorder %s29, 2
      // Predicated region
      $region61: #{daud_v2_forward.1} parent=5 // pred_check
        %p457 = pneg %p456
      $region62: #{daud_v2_forward.1} parent=5 // pred_check_branch
        %459 = sbr.rel (%p457) target = $region64
      $region63: #{daud_v2_forward.1} parent=5 // pred_region
        // Predicated region
        $region65: #{daud_v2_forward.1} parent=63 // pred_check
          %p460 = pneg %p63
        $region66: #{daud_v2_forward.1} parent=63 // pred_check_branch
          %462 = sbr.rel (%p460) target = $region68
        $region67: #{daud_v2_forward.1} parent=63 // pred_region
          %p463 = scmp.lt.s32.totalorder %s36, 1
          %s464 = scalar_select %p463, %s36, 1
          %p465 = scmp.lt.s32.totalorder %s37, 0
          %s466 = scalar_select %p465, %s37, 0
          %s467 = smul.addr %s464, 4
          %s468 = sadd.s32 %s466, %s467
          %s469 = smul.addr %s468, 8
          %s470 = scalar_lea.vmem %s1, %s469
        $region68: #{daud_v2_forward.1} parent=63 // pred_fallthru
          _
        // Predicated region
        $region69: #{daud_v2_forward.1} parent=63 // pred_check
          %p471 = pneg %p91
        $region70: #{daud_v2_forward.1} parent=63 // pred_check_branch
          %473 = sbr.rel (%p471) target = $region72
        $region71: #{daud_v2_forward.1} parent=63 // pred_region
          %s474 = sand.u32 %s81, 1
          %s475 = sand.u32 %s81, 1
          %s476 = smul.addr %s475, 16
          %s477 = scalar_lea.vmem [#allocation4], %s476
          %s478 = sld [smem:[#allocation3 + %s36]]
          %s479 = smul.addr %s478, 8
          %s480 = scalar_lea.vmem %s2, %s479
          // Predicated region
          $region73: #{daud_v2_forward.1} parent=71 // pred_check
            _
          $region74: #{daud_v2_forward.1} parent=71 // pred_check_branch
            %482 = sbr.rel (0) target = $region76
          $region75: #{daud_v2_forward.1} parent=71 // pred_region
            // Predicated region
            $region77: #{daud_v2_forward.1} parent=75 // pred_check
              _
            $region78: #{daud_v2_forward.1} parent=75 // pred_check_branch
              %484 = sbr.rel (0) target = $region80
            $region79: #{daud_v2_forward.1} parent=75 // pred_region
              // Predicated region
              $region92: #{daud_v2_forward.1} parent=79 // pred_check
                _
              $region93: #{daud_v2_forward.1} parent=79 // pred_check_branch
                %501 = sbr.rel (0) target = $region95
              $region94: #{daud_v2_forward.1} parent=79 // pred_region
                loop: start=0, step=1, limit=1
                $region96: #{daud_v2_forward.1} parent=94 // loop_pre_header
                  _
                $region97: #{daud_v2_forward.1} parent=94 // loop_header
                  %s503 = sphi 0, %s507
                  %p504 = scmp.ge.s32.totalorder %s503, 1
                  %s508 = sphi %s480, %s480
                  %s509 = sphi %s477, %s477
                $region98: #{daud_v2_forward.1} parent=94 // loop_header_branch
                  %506 = sbr.rel (%p504) target = $region102
                $region99: #{daud_v2_forward.1} parent=94 // loop_body
                  %v510 = vld [vmem:[%s508] sm:$0xff]
                  %511 = vst [vmem:[%s509] sm:$0xff] %v510
                  %v512 = vld [vmem:[%s508 + $0x18] sm:$0xff]
                  %513 = vst [vmem:[%s509 + $0x8] sm:$0xff] %v512
                $region100: #{daud_v2_forward.1} parent=94 // loop_footer
                  %s507 = sadd.s32 1, %s503
                $region101: #{daud_v2_forward.1} parent=94 // loop_footer_branch
                  %502 = sbr.rel target = $region97
                $region102: #{daud_v2_forward.1} parent=94 // loop_exit
                  _
              $region95: #{daud_v2_forward.1} parent=79 // pred_fallthru
                _
              // Predicated region
              $region103: #{daud_v2_forward.1} parent=79 // pred_check
                _
              $region104: #{daud_v2_forward.1} parent=79 // pred_check_branch
                %515 = sbr.rel target = $region106
              $region105: #{daud_v2_forward.1} parent=79 // pred_region
                _
              $region106: #{daud_v2_forward.1} parent=79 // pred_fallthru
                _
            $region80: #{daud_v2_forward.1} parent=75 // pred_fallthru
              _
            // Predicated region
            $region81: #{daud_v2_forward.1} parent=75 // pred_check
              _
            $region82: #{daud_v2_forward.1} parent=75 // pred_check_branch
              %486 = sbr.rel target = $region84
            $region83: #{daud_v2_forward.1} parent=75 // pred_region
              loop: start=0, step=1, limit=1
              $region85: #{daud_v2_forward.1} parent=83 // loop_pre_header
                _
              $region86: #{daud_v2_forward.1} parent=83 // loop_header
                %s489 = sphi 0, %s493
                %p490 = scmp.ge.s32.totalorder %s489, 1
                %s494 = sphi %s480, %s480
                %s495 = sphi %s477, %s477
              $region87: #{daud_v2_forward.1} parent=83 // loop_header_branch
                %492 = sbr.rel (%p490) target = $region91
              $region88: #{daud_v2_forward.1} parent=83 // loop_body
                %v496 = vld [vmem:[%s494] sm:$0xff]
                %497 = vst [vmem:[%s495] sm:$0xff] %v496
                %v498 = vld [vmem:[%s494 + $0x18] sm:$0xff]
                %499 = vst [vmem:[%s495 + $0x8] sm:$0xff] %v498
              $region89: #{daud_v2_forward.1} parent=83 // loop_footer
                %s493 = sadd.s32 1, %s489
              $region90: #{daud_v2_forward.1} parent=83 // loop_footer_branch
                %488 = sbr.rel target = $region86
              $region91: #{daud_v2_forward.1} parent=83 // loop_exit
                _
            $region84: #{daud_v2_forward.1} parent=75 // pred_fallthru
              _
          $region76: #{daud_v2_forward.1} parent=71 // pred_fallthru
            _
          %516 = vnop
        $region72: #{daud_v2_forward.1} parent=63 // pred_fallthru
          _
      $region64: #{daud_v2_forward.1} parent=5 // pred_fallthru
        _
      %p517 = scmp.le.s32.totalorder 1, %s29
      %p518 = scmp.lt.s32.totalorder %s29, 3
      %p519 = pnand %p517, %p518
      %p520 = pneg %p519
      // Predicated region
      $region107: #{daud_v2_forward.1} parent=5 // pred_check
        _
      $region108: #{daud_v2_forward.1} parent=5 // pred_check_branch
        %522 = sbr.rel (%p519) target = $region110
      $region109: #{daud_v2_forward.1} parent=5 // pred_region
        %s523 = ssub.s32 %s29, 1
        %s524 = sand.u32 %s84, 1
        %s525 = sand.u32 %s84, 1
        %s526 = smul.addr %s525, 16
        %s527 = scalar_lea.vmem [#allocation4], %s526
        // Predicated region
        $region111: #{daud_v2_forward.1} parent=109 // pred_check
          %p528 = pneg %p97
        $region112: #{daud_v2_forward.1} parent=109 // pred_check_branch
          %530 = sbr.rel (%p528) target = $region114
        $region113: #{daud_v2_forward.1} parent=109 // pred_region
          _
        $region114: #{daud_v2_forward.1} parent=109 // pred_fallthru
          _
        %p531 = scmp.lt.s32.totalorder %s38, 1
        %s532 = scalar_select %p531, %s38, 1
        %p533 = scmp.lt.s32.totalorder %s39, 0
        %s534 = scalar_select %p533, %s39, 0
        %s535 = smul.addr %s532, 4
        %s536 = sadd.s32 %s534, %s535
        %s537 = smul.addr %s536, 8
        %s538 = scalar_lea.vmem %s1, %s537
        %p539 = pneg %p69
        %p540 = pneg %p66
        %s541 = sand.u32 %s84, 1
        %s542 = sand.u32 %s84, 1
        %s543 = smul.addr %s542, 16
        %s544 = scalar_lea.vmem [#allocation4], %s543
        %p545 = pneg %p97
        %p546 = pneg %p94
        %p547 = pneg %p118
        %p548 = pneg %p115
        %p549 = pneg %p139
        %p550 = pneg %p136
        %p551 = pneg %p160
        %p552 = pneg %p157
        %p553 = pneg %p181
        %p554 = pneg %p178
        %p555 = pneg %p202
        %p556 = pneg %p199
        %p557 = pneg %p223
        %p558 = pneg %p220
        %p559 = pneg %p244
        %p560 = pneg %p241
        %p561 = pneg %p265
        %p562 = pneg %p262
        %p563 = pneg %p286
        %p564 = pneg %p283
        %p565 = pneg %p307
        %p566 = pneg %p304
        %p567 = pneg %p328
        %p568 = pneg %p325
        %p569 = pneg %p349
        %p570 = pneg %p346
        %p571 = pneg %p377
        %p572 = pneg %p374
        %p573 = scmp.lt.s32.totalorder %s38, 1
        %s574 = scalar_select %p573, %s38, 1
        %p575 = scmp.lt.s32.totalorder %s39, 0
        %s576 = scalar_select %p575, %s39, 0
        %s577 = smul.addr %s574, 4
        %s578 = sadd.s32 %s576, %s577
        %s579 = smul.addr %s578, 8
        %s580 = scalar_lea.vmem %s15, %s579
        %p581 = pneg %p405
        %p582 = pneg %p402
        %p583 = scmp.lt.s32.totalorder %s38, 1
        %s584 = scalar_select %p583, %s38, 1
        %p585 = scmp.lt.s32.totalorder %s39, 0
        %s586 = scalar_select %p585, %s39, 0
        %s587 = smul.addr %s584, 2
        %s588 = sadd.s32 %s586, %s587
        %s589 = smul.addr %s588, 8
        %s590 = scalar_lea.vmem %s16, %s589
        %p591 = scmp.lt.s32.totalorder %s38, 1
        %s592 = scalar_select %p591, %s38, 1
        %p593 = scmp.lt.s32.totalorder %s39, 0
        %s594 = scalar_select %p593, %s39, 0
        %s595 = smul.addr %s592, 4
        %s596 = sadd.s32 %s594, %s595
        %s597 = smul.addr %s596, 8
        %s598 = scalar_lea.vmem %s1, %s597
        %s599 = sld [smem:[#allocation3 + %s38]]
        %p600 = scmp.lt.s32.totalorder %s38, 1
        %s601 = scalar_select %p600, %s38, 1
        %p602 = scmp.lt.s32.totalorder %s39, 0
        %s603 = scalar_select %p602, %s39, 0
        %s604 = smul.addr %s601, 4
        %s605 = sadd.s32 %s603, %s604
        %s606 = smul.addr %s605, 8
        %s607 = scalar_lea.vmem %s15, %s606
        %p608 = scmp.lt.s32.totalorder %s38, 1
        %s609 = scalar_select %p608, %s38, 1
        %p610 = scmp.lt.s32.totalorder %s39, 0
        %s611 = scalar_select %p610, %s39, 0
        %s612 = smul.addr %s609, 2
        %s613 = sadd.s32 %s611, %s612
        %s614 = smul.addr %s613, 8
        %s615 = scalar_lea.vmem %s16, %s614
        %v616 = vld [vmem:[%s598] sm:$0xff]
        %v617 = vld [vmem:[%s598 + $0x8] sm:$0xff]
        %v618 = vld [vmem:[%s598 + $0x10] sm:$0xff]
        %v619 = vld [vmem:[%s598 + $0x18] sm:$0xff]
        %v620 = vld [vmem:[%s3] sm:$0xff]
        %v621 = vld [vmem:[%s3 + $0x8] sm:$0xff]
        %v622 = vld [vmem:[%s3 + $0x10] sm:$0xff]
        %v623 = vld [vmem:[%s3 + $0x18] sm:$0xff]
        %v624 = vld [vmem:[%s4] sm:$0xff]
        %v625 = vld [vmem:[%s4 + $0x8] sm:$0xff]
        %v626 = vld [vmem:[%s4 + $0x10] sm:$0xff]
        %v627 = vld [vmem:[%s4 + $0x18] sm:$0xff]
        %629 = vset.pattern.permute.xlu0 0
        %630 = vperm.xlu0 %629, %v624
        %v631 = vpop.permute.xlu0 %630
        %634 = vset.pattern.permute.xlu0 0
        %635 = vperm.xlu0 %634, %v625
        %v636 = vpop.permute.xlu0 %635
        %639 = vset.pattern.permute.xlu0 0
        %640 = vperm.xlu0 %639, %v626
        %v641 = vpop.permute.xlu0 %640
        %644 = vset.pattern.permute.xlu0 0
        %645 = vperm.xlu0 %644, %v627
        %v646 = vpop.permute.xlu0 %645
        %vm648 = vcmask 261120
        %v650 = vsel %vm648, %v620, 0
        %v653 = vsel %vm648, %v621, 0
        %v656 = vsel %vm648, %v622, 0
        %v659 = vsel %vm648, %v623, 0
        %661 = vmatprep.subr.mxu0 0.0
        %662 = vmatpush1.msra.mxu0 %v616
        %663 = vmatprep.subr.mxu0 0.0
        %664 = vmatpush1.msra.mxu0 %v617
        %665 = vmatprep.subr.mxu0 0.0
        %666 = vmatpush1.msra.mxu0 %v618
        %667 = vmatprep.subr.mxu0 0.0
        %668 = vmatpush1.msra.mxu0 %v619
        %669 = vmatprep.subr.mxu0 0.0
        %670 = vmatpush1.msra.mxu0 0.0
        %671 = vmatprep.subr.mxu0 0.0
        %672 = vmatpush1.msra.mxu0 0.0
        %673 = vmatprep.subr.mxu0 0.0
        %674 = vmatpush1.msra.mxu0 0.0
        %675 = vmatprep.subr.mxu0 0.0
        %676 = vmatpush1.msra.mxu0 0.0
        %677 = vmatprep.subr.mxu0 0.0
        %678 = vmatpush1.msra.mxu0 0.0
        %679 = vmatprep.subr.mxu0 0.0
        %680 = vmatpush1.msra.mxu0 0.0
        %681 = vmatprep.subr.mxu0 0.0
        %682 = vmatpush1.msra.mxu0 0.0
        %683 = vmatprep.subr.mxu0 0.0
        %684 = vmatpush1.msra.mxu0 0.0
        %685 = vmatprep.subr.mxu0 0.0
        %686 = vmatpush1.msra.mxu0 0.0
        %687 = vmatprep.subr.mxu0 0.0
        %688 = vmatpush1.msra.mxu0 0.0
        %689 = vmatprep.subr.mxu0 0.0
        %690 = vmatpush1.msra.mxu0 0.0
        %691 = vmatprep.subr.mxu0 0.0
        %692 = vmatpush1.msra.mxu0 0.0
        %693 = vmatprep.subr.mxu0 0.0
        %694 = vmatpush1.msra.mxu0 0.0
        %695 = vmatprep.subr.mxu0 0.0
        %696 = vmatpush1.msra.mxu0 0.0
        %697 = vmatprep.subr.mxu0 0.0
        %698 = vmatpush1.msra.mxu0 0.0
        %699 = vmatprep.subr.mxu0 0.0
        %700 = vmatpush1.msra.mxu0 0.0
        %701 = vmatprep.subr.mxu0 0.0
        %702 = vmatpush1.msra.mxu0 0.0
        %703 = vmatprep.subr.mxu0 0.0
        %704 = vmatpush1.msra.mxu0 0.0
        %705 = vmatprep.subr.mxu0 0.0
        %706 = vmatpush1.msra.mxu0 0.0
        %707 = vmatprep.subr.mxu0 0.0
        %708 = vmatpush1.msra.mxu0 0.0
        %709 = vmatprep.subr.mxu0 0.0
        %710 = vmatpush1.msra.mxu0 0.0
        %711 = vmatprep.subr.mxu0 0.0
        %712 = vmatpush1.msra.mxu0 0.0
        %713 = vmatprep.subr.mxu0 0.0
        %714 = vmatpush1.msra.mxu0 0.0
        %715 = vmatprep.subr.mxu0 0.0
        %716 = vmatpush1.msra.mxu0 0.0
        %717 = vmatprep.subr.mxu0 0.0
        %718 = vmatpush1.msra.mxu0 0.0
        %719 = vmatprep.subr.mxu0 0.0
        %720 = vmatpush1.msra.mxu0 0.0
        %721 = vmatprep.subr.mxu0 0.0
        %722 = vmatpush1.msra.mxu0 0.0
        %723 = vmatprep.subr.mxu0 0.0
        %724 = vmatpush1.msra.mxu0 0.0
        %725 = vmatprep.mubr.f32.mxu0 0.0
        %726 = vmatmul.mubr.f32.gmra.mrb[0].mxu0 %v650
        %v727 = vpop.f32.mrb[0].mxu0
        %v728 = vadd.f32 %v631, %v727
        %v729 = vpop.f32.mrb[0].mxu0
        %730 = vmatprep.mubr.f32.mxu0 0.0
        %731 = vmatmul.mubr.f32.gmra.mrb[0].mxu0 %v653
        %v732 = vpop.f32.mrb[0].mxu0
        %v733 = vadd.f32 %v636, %v732
        %v734 = vpop.f32.mrb[0].mxu0
        %735 = vmatprep.mubr.f32.mxu0 0.0
        %736 = vmatmul.mubr.f32.gmra.mrb[0].mxu0 %v656
        %v737 = vpop.f32.mrb[0].mxu0
        %v738 = vadd.f32 %v641, %v737
        %v739 = vpop.f32.mrb[0].mxu0
        %740 = vmatprep.mubr.f32.mxu0 0.0
        %741 = vmatmul.mubr.f32.gmra.mrb[0].mxu0 %v659
        %v742 = vpop.f32.mrb[0].mxu0
        %v743 = vadd.f32 %v646, %v742
        %v744 = vpop.f32.mrb[0].mxu0
        %745 = vdwg.mxu0
        %v746 = vmax.f32 %v728, 0.0
        %v747 = vmax.f32 %v733, 0.0
        %v748 = vmax.f32 %v738, 0.0
        %v749 = vmax.f32 %v743, 0.0
        %v750 = vld [vmem:[%s5] sm:$0xff]
        %v751 = vld [vmem:[%s5 + $0x8] sm:$0xff]
        %v752 = vld [vmem:[%s5 + $0x10] sm:$0xff]
        %v753 = vld [vmem:[%s5 + $0x18] sm:$0xff]
        %v754 = vld [vmem:[%s6] sm:$0xff]
        %v755 = vld [vmem:[%s6 + $0x8] sm:$0xff]
        %v756 = vld [vmem:[%s6 + $0x10] sm:$0xff]
        %v757 = vld [vmem:[%s6 + $0x18] sm:$0xff]
        %759 = vset.pattern.permute.xlu0 0
        %760 = vperm.xlu0 %759, %v754
        %v761 = vpop.permute.xlu0 %760
        %764 = vset.pattern.permute.xlu0 0
        %765 = vperm.xlu0 %764, %v755
        %v766 = vpop.permute.xlu0 %765
        %769 = vset.pattern.permute.xlu0 0
        %770 = vperm.xlu0 %769, %v756
        %v771 = vpop.permute.xlu0 %770
        %774 = vset.pattern.permute.xlu0 0
        %775 = vperm.xlu0 %774, %v757
        %v776 = vpop.permute.xlu0 %775
        %v779 = vsel %vm648, %v750, 0
        %v782 = vsel %vm648, %v751, 0
        %v785 = vsel %vm648, %v752, 0
        %v788 = vsel %vm648, %v753, 0
        %790 = vmatprep.subr.mxu0 0.0
        %791 = vmatpush1.msra.mxu0 %v746
        %792 = vmatprep.subr.mxu0 0.0
        %793 = vmatpush1.msra.mxu0 %v747
        %794 = vmatprep.subr.mxu0 0.0
        %795 = vmatpush1.msra.mxu0 %v748
        %796 = vmatprep.subr.mxu0 0.0
        %797 = vmatpush1.msra.mxu0 %v749
        %798 = vmatprep.subr.mxu0 0.0
        %799 = vmatpush1.msra.mxu0 0.0
        %800 = vmatprep.subr.mxu0 0.0
        %801 = vmatpush1.msra.mxu0 0.0
        %802 = vmatprep.subr.mxu0 0.0
        %803 = vmatpush1.msra.mxu0 0.0
        %804 = vmatprep.subr.mxu0 0.0
        %805 = vmatpush1.msra.mxu0 0.0
        %806 = vmatprep.subr.mxu0 0.0
        %807 = vmatpush1.msra.mxu0 0.0
        %808 = vmatprep.subr.mxu0 0.0
        %809 = vmatpush1.msra.mxu0 0.0
        %810 = vmatprep.subr.mxu0 0.0
        %811 = vmatpush1.msra.mxu0 0.0
        %812 = vmatprep.subr.mxu0 0.0
        %813 = vmatpush1.msra.mxu0 0.0
        %814 = vmatprep.subr.mxu0 0.0
        %815 = vmatpush1.msra.mxu0 0.0
        %816 = vmatprep.subr.mxu0 0.0
        %817 = vmatpush1.msra.mxu0 0.0
        %818 = vmatprep.subr.mxu0 0.0
        %819 = vmatpush1.msra.mxu0 0.0
        %820 = vmatprep.subr.mxu0 0.0
        %821 = vmatpush1.msra.mxu0 0.0
        %822 = vmatprep.subr.mxu0 0.0
        %823 = vmatpush1.msra.mxu0 0.0
        %824 = vmatprep.subr.mxu0 0.0
        %825 = vmatpush1.msra.mxu0 0.0
        %826 = vmatprep.subr.mxu0 0.0
        %827 = vmatpush1.msra.mxu0 0.0
        %828 = vmatprep.subr.mxu0 0.0
        %829 = vmatpush1.msra.mxu0 0.0
        %830 = vmatprep.subr.mxu0 0.0
        %831 = vmatpush1.msra.mxu0 0.0
        %832 = vmatprep.subr.mxu0 0.0
        %833 = vmatpush1.msra.mxu0 0.0
        %834 = vmatprep.subr.mxu0 0.0
        %835 = vmatpush1.msra.mxu0 0.0
        %836 = vmatprep.subr.mxu0 0.0
        %837 = vmatpush1.msra.mxu0 0.0
        %838 = vmatprep.subr.mxu0 0.0
        %839 = vmatpush1.msra.mxu0 0.0
        %840 = vmatprep.subr.mxu0 0.0
        %841 = vmatpush1.msra.mxu0 0.0
        %842 = vmatprep.subr.mxu0 0.0
        %843 = vmatpush1.msra.mxu0 0.0
        %844 = vmatprep.subr.mxu0 0.0
        %845 = vmatpush1.msra.mxu0 0.0
        %846 = vmatprep.subr.mxu0 0.0
        %847 = vmatpush1.msra.mxu0 0.0
        %848 = vmatprep.subr.mxu0 0.0
        %849 = vmatpush1.msra.mxu0 0.0
        %850 = vmatprep.subr.mxu0 0.0
        %851 = vmatpush1.msra.mxu0 0.0
        %852 = vmatprep.subr.mxu0 0.0
        %853 = vmatpush1.msra.mxu0 0.0
        %854 = vmatprep.mubr.f32.mxu0 0.0
        %855 = vmatmul.mubr.f32.gmra.mrb[0].mxu0 %v779
        %v856 = vpop.f32.mrb[0].mxu0
        %v857 = vadd.f32 %v761, %v856
        %v858 = vpop.f32.mrb[0].mxu0
        %859 = vmatprep.mubr.f32.mxu0 0.0
        %860 = vmatmul.mubr.f32.gmra.mrb[0].mxu0 %v782
        %v861 = vpop.f32.mrb[0].mxu0
        %v862 = vadd.f32 %v766, %v861
        %v863 = vpop.f32.mrb[0].mxu0
        %864 = vmatprep.mubr.f32.mxu0 0.0
        %865 = vmatmul.mubr.f32.gmra.mrb[0].mxu0 %v785
        %v866 = vpop.f32.mrb[0].mxu0
        %v867 = vadd.f32 %v771, %v866
        %v868 = vpop.f32.mrb[0].mxu0
        %869 = vmatprep.mubr.f32.mxu0 0.0
        %870 = vmatmul.mubr.f32.gmra.mrb[0].mxu0 %v788
        %v871 = vpop.f32.mrb[0].mxu0
        %v872 = vadd.f32 %v776, %v871
        %v873 = vpop.f32.mrb[0].mxu0
        %874 = vdwg.mxu0
        %v875 = vmax.f32 %v857, 0.0
        %v876 = vmax.f32 %v862, 0.0
        %v877 = vmax.f32 %v867, 0.0
        %v878 = vmax.f32 %v872, 0.0
        %v879 = vld [vmem:[%s7] sm:$0xff]
        %v880 = vld [vmem:[%s7 + $0x8] sm:$0xff]
        %v881 = vld [vmem:[%s8] sm:$0xff]
        %v882 = vld [vmem:[%s8 + $0x8] sm:$0xff]
        %884 = vset.pattern.permute.xlu0 0
        %885 = vperm.xlu0 %884, %v881
        %v886 = vpop.permute.xlu0 %885
        %889 = vset.pattern.permute.xlu0 0
        %890 = vperm.xlu0 %889, %v882
        %v891 = vpop.permute.xlu0 %890
        %v894 = vsel %vm648, %v879, 0
        %v897 = vsel %vm648, %v880, 0
        %899 = vmatprep.subr.mxu0 0.0
        %900 = vmatpush1.msra.mxu0 %v875
        %901 = vmatprep.subr.mxu0 0.0
        %902 = vmatpush1.msra.mxu0 %v876
        %903 = vmatprep.subr.mxu0 0.0
        %904 = vmatpush1.msra.mxu0 %v877
        %905 = vmatprep.subr.mxu0 0.0
        %906 = vmatpush1.msra.mxu0 %v878
        %907 = vmatprep.subr.mxu0 0.0
        %908 = vmatpush1.msra.mxu0 0.0
        %909 = vmatprep.subr.mxu0 0.0
        %910 = vmatpush1.msra.mxu0 0.0
        %911 = vmatprep.subr.mxu0 0.0
        %912 = vmatpush1.msra.mxu0 0.0
        %913 = vmatprep.subr.mxu0 0.0
        %914 = vmatpush1.msra.mxu0 0.0
        %915 = vmatprep.subr.mxu0 0.0
        %916 = vmatpush1.msra.mxu0 0.0
        %917 = vmatprep.subr.mxu0 0.0
        %918 = vmatpush1.msra.mxu0 0.0
        %919 = vmatprep.subr.mxu0 0.0
        %920 = vmatpush1.msra.mxu0 0.0
        %921 = vmatprep.subr.mxu0 0.0
        %922 = vmatpush1.msra.mxu0 0.0
        %923 = vmatprep.subr.mxu0 0.0
        %924 = vmatpush1.msra.mxu0 0.0
        %925 = vmatprep.subr.mxu0 0.0
        %926 = vmatpush1.msra.mxu0 0.0
        %927 = vmatprep.subr.mxu0 0.0
        %928 = vmatpush1.msra.mxu0 0.0
        %929 = vmatprep.subr.mxu0 0.0
        %930 = vmatpush1.msra.mxu0 0.0
        %931 = vmatprep.subr.mxu0 0.0
        %932 = vmatpush1.msra.mxu0 0.0
        %933 = vmatprep.subr.mxu0 0.0
        %934 = vmatpush1.msra.mxu0 0.0
        %935 = vmatprep.subr.mxu0 0.0
        %936 = vmatpush1.msra.mxu0 0.0
        %937 = vmatprep.subr.mxu0 0.0
        %938 = vmatpush1.msra.mxu0 0.0
        %939 = vmatprep.subr.mxu0 0.0
        %940 = vmatpush1.msra.mxu0 0.0
        %941 = vmatprep.subr.mxu0 0.0
        %942 = vmatpush1.msra.mxu0 0.0
        %943 = vmatprep.subr.mxu0 0.0
        %944 = vmatpush1.msra.mxu0 0.0
        %945 = vmatprep.subr.mxu0 0.0
        %946 = vmatpush1.msra.mxu0 0.0
        %947 = vmatprep.subr.mxu0 0.0
        %948 = vmatpush1.msra.mxu0 0.0
        %949 = vmatprep.subr.mxu0 0.0
        %950 = vmatpush1.msra.mxu0 0.0
        %951 = vmatprep.subr.mxu0 0.0
        %952 = vmatpush1.msra.mxu0 0.0
        %953 = vmatprep.subr.mxu0 0.0
        %954 = vmatpush1.msra.mxu0 0.0
        %955 = vmatprep.subr.mxu0 0.0
        %956 = vmatpush1.msra.mxu0 0.0
        %957 = vmatprep.subr.mxu0 0.0
        %958 = vmatpush1.msra.mxu0 0.0
        %959 = vmatprep.subr.mxu0 0.0
        %960 = vmatpush1.msra.mxu0 0.0
        %961 = vmatprep.subr.mxu0 0.0
        %962 = vmatpush1.msra.mxu0 0.0
        %963 = vmatprep.mubr.f32.mxu0 0.0
        %964 = vmatmul.mubr.f32.gmra.mrb[0].mxu0 %v894
        %v965 = vpop.f32.mrb[0].mxu0
        %v966 = vadd.f32 %v886, %v965
        %v967 = vpop.f32.mrb[0].mxu0
        %968 = vmatprep.mubr.f32.mxu0 0.0
        %969 = vmatmul.mubr.f32.gmra.mrb[0].mxu0 %v897
        %v970 = vpop.f32.mrb[0].mxu0
        %v971 = vadd.f32 %v891, %v970
        %v972 = vpop.f32.mrb[0].mxu0
        %973 = vdwg.mxu0
        %974 = vst [vmem:[%s615] sm:$0xff] %v966
        %975 = vst [vmem:[%s615 + $0x8] sm:$0xff] %v971
        %v976 = vld [vmem:[%s527] sm:$0xff]
        %v977 = vld [vmem:[%s527 + $0x8] sm:$0xff]
        %979 = vset.pattern.permute.xlu0 0
        %980 = vperm.xlu0 %979, %v976
        %v981 = vpop.permute.xlu0 %980
        %984 = vset.pattern.permute.xlu0 0
        %985 = vperm.xlu0 %984, %v977
        %v986 = vpop.permute.xlu0 %985
        %v988 = vadd.f32 %v966, %v981
        %v989 = vadd.f32 %v971, %v986
        %v990 = vld [vmem:[%s9] sm:$0xff]
        %v991 = vld [vmem:[%s9 + $0x8] sm:$0xff]
        %v992 = vld [vmem:[%s9 + $0x10] sm:$0xff]
        %v993 = vld [vmem:[%s9 + $0x18] sm:$0xff]
        %v994 = vld [vmem:[%s10] sm:$0xff]
        %v995 = vld [vmem:[%s10 + $0x8] sm:$0xff]
        %v996 = vld [vmem:[%s10 + $0x10] sm:$0xff]
        %v997 = vld [vmem:[%s10 + $0x18] sm:$0xff]
        %999 = vset.pattern.permute.xlu0 0
        %1000 = vperm.xlu0 %999, %v994
        %v1001 = vpop.permute.xlu0 %1000
        %1004 = vset.pattern.permute.xlu0 0
        %1005 = vperm.xlu0 %1004, %v995
        %v1006 = vpop.permute.xlu0 %1005
        %1009 = vset.pattern.permute.xlu0 0
        %1010 = vperm.xlu0 %1009, %v996
        %v1011 = vpop.permute.xlu0 %1010
        %1014 = vset.pattern.permute.xlu0 0
        %1015 = vperm.xlu0 %1014, %v997
        %v1016 = vpop.permute.xlu0 %1015
        %vm1018 = vcmask 130048
        %v1020 = vsel %vm1018, %v990, 0
        %v1023 = vsel %vm1018, %v991, 0
        %v1026 = vsel %vm1018, %v992, 0
        %v1029 = vsel %vm1018, %v993, 0
        %1031 = vmatprep.subr.mxu0 0.0
        %1032 = vmatpush1.msra.mxu0 %v988
        %1033 = vmatprep.subr.mxu0 0.0
        %1034 = vmatpush1.msra.mxu0 %v989
        %1035 = vmatprep.subr.mxu0 0.0
        %1036 = vmatpush1.msra.mxu0 0.0
        %1037 = vmatprep.subr.mxu0 0.0
        %1038 = vmatpush1.msra.mxu0 0.0
        %1039 = vmatprep.subr.mxu0 0.0
        %1040 = vmatpush1.msra.mxu0 0.0
        %1041 = vmatprep.subr.mxu0 0.0
        %1042 = vmatpush1.msra.mxu0 0.0
        %1043 = vmatprep.subr.mxu0 0.0
        %1044 = vmatpush1.msra.mxu0 0.0
        %1045 = vmatprep.subr.mxu0 0.0
        %1046 = vmatpush1.msra.mxu0 0.0
        %1047 = vmatprep.subr.mxu0 0.0
        %1048 = vmatpush1.msra.mxu0 0.0
        %1049 = vmatprep.subr.mxu0 0.0
        %1050 = vmatpush1.msra.mxu0 0.0
        %1051 = vmatprep.subr.mxu0 0.0
        %1052 = vmatpush1.msra.mxu0 0.0
        %1053 = vmatprep.subr.mxu0 0.0
        %1054 = vmatpush1.msra.mxu0 0.0
        %1055 = vmatprep.subr.mxu0 0.0
        %1056 = vmatpush1.msra.mxu0 0.0
        %1057 = vmatprep.subr.mxu0 0.0
        %1058 = vmatpush1.msra.mxu0 0.0
        %1059 = vmatprep.subr.mxu0 0.0
        %1060 = vmatpush1.msra.mxu0 0.0
        %1061 = vmatprep.subr.mxu0 0.0
        %1062 = vmatpush1.msra.mxu0 0.0
        %1063 = vmatprep.subr.mxu0 0.0
        %1064 = vmatpush1.msra.mxu0 0.0
        %1065 = vmatprep.subr.mxu0 0.0
        %1066 = vmatpush1.msra.mxu0 0.0
        %1067 = vmatprep.subr.mxu0 0.0
        %1068 = vmatpush1.msra.mxu0 0.0
        %1069 = vmatprep.subr.mxu0 0.0
        %1070 = vmatpush1.msra.mxu0 0.0
        %1071 = vmatprep.subr.mxu0 0.0
        %1072 = vmatpush1.msra.mxu0 0.0
        %1073 = vmatprep.subr.mxu0 0.0
        %1074 = vmatpush1.msra.mxu0 0.0
        %1075 = vmatprep.subr.mxu0 0.0
        %1076 = vmatpush1.msra.mxu0 0.0
        %1077 = vmatprep.subr.mxu0 0.0
        %1078 = vmatpush1.msra.mxu0 0.0
        %1079 = vmatprep.subr.mxu0 0.0
        %1080 = vmatpush1.msra.mxu0 0.0
        %1081 = vmatprep.subr.mxu0 0.0
        %1082 = vmatpush1.msra.mxu0 0.0
        %1083 = vmatprep.subr.mxu0 0.0
        %1084 = vmatpush1.msra.mxu0 0.0
        %1085 = vmatprep.subr.mxu0 0.0
        %1086 = vmatpush1.msra.mxu0 0.0
        %1087 = vmatprep.subr.mxu0 0.0
        %1088 = vmatpush1.msra.mxu0 0.0
        %1089 = vmatprep.subr.mxu0 0.0
        %1090 = vmatpush1.msra.mxu0 0.0
        %1091 = vmatprep.subr.mxu0 0.0
        %1092 = vmatpush1.msra.mxu0 0.0
        %1093 = vmatprep.subr.mxu0 0.0
        %1094 = vmatpush1.msra.mxu0 0.0
        %1095 = vmatprep.mubr.f32.mxu0 0.0
        %1096 = vmatmul.mubr.f32.gmra.mrb[0].mxu0 %v1020
        %v1097 = vpop.f32.mrb[0].mxu0
        %v1098 = vadd.f32 %v1001, %v1097
        %v1099 = vpop.f32.mrb[0].mxu0
        %1100 = vmatprep.mubr.f32.mxu0 0.0
        %1101 = vmatmul.mubr.f32.gmra.mrb[0].mxu0 %v1023
        %v1102 = vpop.f32.mrb[0].mxu0
        %v1103 = vadd.f32 %v1006, %v1102
        %v1104 = vpop.f32.mrb[0].mxu0
        %1105 = vmatprep.mubr.f32.mxu0 0.0
        %1106 = vmatmul.mubr.f32.gmra.mrb[0].mxu0 %v1026
        %v1107 = vpop.f32.mrb[0].mxu0
        %v1108 = vadd.f32 %v1011, %v1107
        %v1109 = vpop.f32.mrb[0].mxu0
        %1110 = vmatprep.mubr.f32.mxu0 0.0
        %1111 = vmatmul.mubr.f32.gmra.mrb[0].mxu0 %v1029
        %v1112 = vpop.f32.mrb[0].mxu0
        %v1113 = vadd.f32 %v1016, %v1112
        %v1114 = vpop.f32.mrb[0].mxu0
        %1115 = vdwg.mxu0
        %v1116 = vmax.f32 %v1098, 0.0
        %v1117 = vmax.f32 %v1103, 0.0
        %v1118 = vmax.f32 %v1108, 0.0
        %v1119 = vmax.f32 %v1113, 0.0
        %v1120 = vld [vmem:[%s11] sm:$0xff]
        %v1121 = vld [vmem:[%s11 + $0x8] sm:$0xff]
        %v1122 = vld [vmem:[%s11 + $0x10] sm:$0xff]
        %v1123 = vld [vmem:[%s11 + $0x18] sm:$0xff]
        %v1124 = vld [vmem:[%s12] sm:$0xff]
        %v1125 = vld [vmem:[%s12 + $0x8] sm:$0xff]
        %v1126 = vld [vmem:[%s12 + $0x10] sm:$0xff]
        %v1127 = vld [vmem:[%s12 + $0x18] sm:$0xff]
        %1129 = vset.pattern.permute.xlu0 0
        %1130 = vperm.xlu0 %1129, %v1124
        %v1131 = vpop.permute.xlu0 %1130
        %1134 = vset.pattern.permute.xlu0 0
        %1135 = vperm.xlu0 %1134, %v1125
        %v1136 = vpop.permute.xlu0 %1135
        %1139 = vset.pattern.permute.xlu0 0
        %1140 = vperm.xlu0 %1139, %v1126
        %v1141 = vpop.permute.xlu0 %1140
        %1144 = vset.pattern.permute.xlu0 0
        %1145 = vperm.xlu0 %1144, %v1127
        %v1146 = vpop.permute.xlu0 %1145
        %v1149 = vsel %vm648, %v1120, 0
        %v1152 = vsel %vm648, %v1121, 0
        %v1155 = vsel %vm648, %v1122, 0
        %v1158 = vsel %vm648, %v1123, 0
        %1160 = vmatprep.subr.mxu0 0.0
        %1161 = vmatpush1.msra.mxu0 %v1116
        %1162 = vmatprep.subr.mxu0 0.0
        %1163 = vmatpush1.msra.mxu0 %v1117
        %1164 = vmatprep.subr.mxu0 0.0
        %1165 = vmatpush1.msra.mxu0 %v1118
        %1166 = vmatprep.subr.mxu0 0.0
        %1167 = vmatpush1.msra.mxu0 %v1119
        %1168 = vmatprep.subr.mxu0 0.0
        %1169 = vmatpush1.msra.mxu0 0.0
        %1170 = vmatprep.subr.mxu0 0.0
        %1171 = vmatpush1.msra.mxu0 0.0
        %1172 = vmatprep.subr.mxu0 0.0
        %1173 = vmatpush1.msra.mxu0 0.0
        %1174 = vmatprep.subr.mxu0 0.0
        %1175 = vmatpush1.msra.mxu0 0.0
        %1176 = vmatprep.subr.mxu0 0.0
        %1177 = vmatpush1.msra.mxu0 0.0
        %1178 = vmatprep.subr.mxu0 0.0
        %1179 = vmatpush1.msra.mxu0 0.0
        %1180 = vmatprep.subr.mxu0 0.0
        %1181 = vmatpush1.msra.mxu0 0.0
        %1182 = vmatprep.subr.mxu0 0.0
        %1183 = vmatpush1.msra.mxu0 0.0
        %1184 = vmatprep.subr.mxu0 0.0
        %1185 = vmatpush1.msra.mxu0 0.0
        %1186 = vmatprep.subr.mxu0 0.0
        %1187 = vmatpush1.msra.mxu0 0.0
        %1188 = vmatprep.subr.mxu0 0.0
        %1189 = vmatpush1.msra.mxu0 0.0
        %1190 = vmatprep.subr.mxu0 0.0
        %1191 = vmatpush1.msra.mxu0 0.0
        %1192 = vmatprep.subr.mxu0 0.0
        %1193 = vmatpush1.msra.mxu0 0.0
        %1194 = vmatprep.subr.mxu0 0.0
        %1195 = vmatpush1.msra.mxu0 0.0
        %1196 = vmatprep.subr.mxu0 0.0
        %1197 = vmatpush1.msra.mxu0 0.0
        %1198 = vmatprep.subr.mxu0 0.0
        %1199 = vmatpush1.msra.mxu0 0.0
        %1200 = vmatprep.subr.mxu0 0.0
        %1201 = vmatpush1.msra.mxu0 0.0
        %1202 = vmatprep.subr.mxu0 0.0
        %1203 = vmatpush1.msra.mxu0 0.0
        %1204 = vmatprep.subr.mxu0 0.0
        %1205 = vmatpush1.msra.mxu0 0.0
        %1206 = vmatprep.subr.mxu0 0.0
        %1207 = vmatpush1.msra.mxu0 0.0
        %1208 = vmatprep.subr.mxu0 0.0
        %1209 = vmatpush1.msra.mxu0 0.0
        %1210 = vmatprep.subr.mxu0 0.0
        %1211 = vmatpush1.msra.mxu0 0.0
        %1212 = vmatprep.subr.mxu0 0.0
        %1213 = vmatpush1.msra.mxu0 0.0
        %1214 = vmatprep.subr.mxu0 0.0
        %1215 = vmatpush1.msra.mxu0 0.0
        %1216 = vmatprep.subr.mxu0 0.0
        %1217 = vmatpush1.msra.mxu0 0.0
        %1218 = vmatprep.subr.mxu0 0.0
        %1219 = vmatpush1.msra.mxu0 0.0
        %1220 = vmatprep.subr.mxu0 0.0
        %1221 = vmatpush1.msra.mxu0 0.0
        %1222 = vmatprep.subr.mxu0 0.0
        %1223 = vmatpush1.msra.mxu0 0.0
        %1224 = vmatprep.mubr.f32.mxu0 0.0
        %1225 = vmatmul.mubr.f32.gmra.mrb[0].mxu0 %v1149
        %v1226 = vpop.f32.mrb[0].mxu0
        %v1227 = vadd.f32 %v1131, %v1226
        %v1228 = vpop.f32.mrb[0].mxu0
        %1229 = vmatprep.mubr.f32.mxu0 0.0
        %1230 = vmatmul.mubr.f32.gmra.mrb[0].mxu0 %v1152
        %v1231 = vpop.f32.mrb[0].mxu0
        %v1232 = vadd.f32 %v1136, %v1231
        %v1233 = vpop.f32.mrb[0].mxu0
        %1234 = vmatprep.mubr.f32.mxu0 0.0
        %1235 = vmatmul.mubr.f32.gmra.mrb[0].mxu0 %v1155
        %v1236 = vpop.f32.mrb[0].mxu0
        %v1237 = vadd.f32 %v1141, %v1236
        %v1238 = vpop.f32.mrb[0].mxu0
        %1239 = vmatprep.mubr.f32.mxu0 0.0
        %1240 = vmatmul.mubr.f32.gmra.mrb[0].mxu0 %v1158
        %v1241 = vpop.f32.mrb[0].mxu0
        %v1242 = vadd.f32 %v1146, %v1241
        %v1243 = vpop.f32.mrb[0].mxu0
        %1244 = vdwg.mxu0
        %v1245 = vmax.f32 %v1227, 0.0
        %v1246 = vmax.f32 %v1232, 0.0
        %v1247 = vmax.f32 %v1237, 0.0
        %v1248 = vmax.f32 %v1242, 0.0
        %v1249 = vld [vmem:[%s13] sm:$0xff]
        %v1250 = vld [vmem:[%s13 + $0x8] sm:$0xff]
        %v1251 = vld [vmem:[%s13 + $0x10] sm:$0xff]
        %v1252 = vld [vmem:[%s13 + $0x18] sm:$0xff]
        %v1253 = vld [vmem:[%s14] sm:$0xff]
        %v1254 = vld [vmem:[%s14 + $0x8] sm:$0xff]
        %v1255 = vld [vmem:[%s14 + $0x10] sm:$0xff]
        %v1256 = vld [vmem:[%s14 + $0x18] sm:$0xff]
        %1258 = vset.pattern.permute.xlu0 0
        %1259 = vperm.xlu0 %1258, %v1253
        %v1260 = vpop.permute.xlu0 %1259
        %1263 = vset.pattern.permute.xlu0 0
        %1264 = vperm.xlu0 %1263, %v1254
        %v1265 = vpop.permute.xlu0 %1264
        %1268 = vset.pattern.permute.xlu0 0
        %1269 = vperm.xlu0 %1268, %v1255
        %v1270 = vpop.permute.xlu0 %1269
        %1273 = vset.pattern.permute.xlu0 0
        %1274 = vperm.xlu0 %1273, %v1256
        %v1275 = vpop.permute.xlu0 %1274
        %v1278 = vsel %vm648, %v1249, 0
        %v1281 = vsel %vm648, %v1250, 0
        %v1284 = vsel %vm648, %v1251, 0
        %v1287 = vsel %vm648, %v1252, 0
        %1289 = vmatprep.subr.mxu0 0.0
        %1290 = vmatpush1.msra.mxu0 %v1245
        %1291 = vmatprep.subr.mxu0 0.0
        %1292 = vmatpush1.msra.mxu0 %v1246
        %1293 = vmatprep.subr.mxu0 0.0
        %1294 = vmatpush1.msra.mxu0 %v1247
        %1295 = vmatprep.subr.mxu0 0.0
        %1296 = vmatpush1.msra.mxu0 %v1248
        %1297 = vmatprep.subr.mxu0 0.0
        %1298 = vmatpush1.msra.mxu0 0.0
        %1299 = vmatprep.subr.mxu0 0.0
        %1300 = vmatpush1.msra.mxu0 0.0
        %1301 = vmatprep.subr.mxu0 0.0
        %1302 = vmatpush1.msra.mxu0 0.0
        %1303 = vmatprep.subr.mxu0 0.0
        %1304 = vmatpush1.msra.mxu0 0.0
        %1305 = vmatprep.subr.mxu0 0.0
        %1306 = vmatpush1.msra.mxu0 0.0
        %1307 = vmatprep.subr.mxu0 0.0
        %1308 = vmatpush1.msra.mxu0 0.0
        %1309 = vmatprep.subr.mxu0 0.0
        %1310 = vmatpush1.msra.mxu0 0.0
        %1311 = vmatprep.subr.mxu0 0.0
        %1312 = vmatpush1.msra.mxu0 0.0
        %1313 = vmatprep.subr.mxu0 0.0
        %1314 = vmatpush1.msra.mxu0 0.0
        %1315 = vmatprep.subr.mxu0 0.0
        %1316 = vmatpush1.msra.mxu0 0.0
        %1317 = vmatprep.subr.mxu0 0.0
        %1318 = vmatpush1.msra.mxu0 0.0
        %1319 = vmatprep.subr.mxu0 0.0
        %1320 = vmatpush1.msra.mxu0 0.0
        %1321 = vmatprep.subr.mxu0 0.0
        %1322 = vmatpush1.msra.mxu0 0.0
        %1323 = vmatprep.subr.mxu0 0.0
        %1324 = vmatpush1.msra.mxu0 0.0
        %1325 = vmatprep.subr.mxu0 0.0
        %1326 = vmatpush1.msra.mxu0 0.0
        %1327 = vmatprep.subr.mxu0 0.0
        %1328 = vmatpush1.msra.mxu0 0.0
        %1329 = vmatprep.subr.mxu0 0.0
        %1330 = vmatpush1.msra.mxu0 0.0
        %1331 = vmatprep.subr.mxu0 0.0
        %1332 = vmatpush1.msra.mxu0 0.0
        %1333 = vmatprep.subr.mxu0 0.0
        %1334 = vmatpush1.msra.mxu0 0.0
        %1335 = vmatprep.subr.mxu0 0.0
        %1336 = vmatpush1.msra.mxu0 0.0
        %1337 = vmatprep.subr.mxu0 0.0
        %1338 = vmatpush1.msra.mxu0 0.0
        %1339 = vmatprep.subr.mxu0 0.0
        %1340 = vmatpush1.msra.mxu0 0.0
        %1341 = vmatprep.subr.mxu0 0.0
        %1342 = vmatpush1.msra.mxu0 0.0
        %1343 = vmatprep.subr.mxu0 0.0
        %1344 = vmatpush1.msra.mxu0 0.0
        %1345 = vmatprep.subr.mxu0 0.0
        %1346 = vmatpush1.msra.mxu0 0.0
        %1347 = vmatprep.subr.mxu0 0.0
        %1348 = vmatpush1.msra.mxu0 0.0
        %1349 = vmatprep.subr.mxu0 0.0
        %1350 = vmatpush1.msra.mxu0 0.0
        %1351 = vmatprep.subr.mxu0 0.0
        %1352 = vmatpush1.msra.mxu0 0.0
        %1353 = vmatprep.mubr.f32.mxu0 0.0
        %1354 = vmatmul.mubr.f32.gmra.mrb[0].mxu0 %v1278
        %v1355 = vpop.f32.mrb[0].mxu0
        %v1356 = vadd.f32 %v1260, %v1355
        %v1357 = vpop.f32.mrb[0].mxu0
        %1358 = vmatprep.mubr.f32.mxu0 0.0
        %1359 = vmatmul.mubr.f32.gmra.mrb[0].mxu0 %v1281
        %v1360 = vpop.f32.mrb[0].mxu0
        %v1361 = vadd.f32 %v1265, %v1360
        %v1362 = vpop.f32.mrb[0].mxu0
        %1363 = vmatprep.mubr.f32.mxu0 0.0
        %1364 = vmatmul.mubr.f32.gmra.mrb[0].mxu0 %v1284
        %v1365 = vpop.f32.mrb[0].mxu0
        %v1366 = vadd.f32 %v1270, %v1365
        %v1367 = vpop.f32.mrb[0].mxu0
        %1368 = vmatprep.mubr.f32.mxu0 0.0
        %1369 = vmatmul.mubr.f32.gmra.mrb[0].mxu0 %v1287
        %v1370 = vpop.f32.mrb[0].mxu0
        %v1371 = vadd.f32 %v1275, %v1370
        %v1372 = vpop.f32.mrb[0].mxu0
        %1373 = vdwg.mxu0
        %1374 = vst [vmem:[%s607] sm:$0xff] %v1356
        %1375 = vst [vmem:[%s607 + $0x8] sm:$0xff] %v1361
        %1376 = vst [vmem:[%s607 + $0x10] sm:$0xff] %v1366
        %1377 = vst [vmem:[%s607 + $0x18] sm:$0xff] %v1371
        %p1378 = scmp.lt.s32.totalorder %s38, 1
        %s1379 = scalar_select %p1378, %s38, 1
        %p1380 = scmp.lt.s32.totalorder %s39, 0
        %s1381 = scalar_select %p1380, %s39, 0
        %s1382 = smul.addr %s1379, 4
        %s1383 = sadd.s32 %s1381, %s1382
        %s1384 = smul.addr %s1383, 8
        %s1385 = scalar_lea.vmem %s15, %s1384
        %p1386 = scmp.lt.s32.totalorder %s38, 1
        %s1387 = scalar_select %p1386, %s38, 1
        %p1388 = scmp.lt.s32.totalorder %s39, 0
        %s1389 = scalar_select %p1388, %s39, 0
        %s1390 = smul.addr %s1387, 2
        %s1391 = sadd.s32 %s1389, %s1390
        %s1392 = smul.addr %s1391, 8
        %s1393 = scalar_lea.vmem %s16, %s1392
        // Predicated region
        $region115: #{daud_v2_forward.1} parent=109 // pred_check
          %p1394 = pneg %p374
        $region116: #{daud_v2_forward.1} parent=109 // pred_check_branch
          %1396 = sbr.rel (%p1394) target = $region118
        $region117: #{daud_v2_forward.1} parent=109 // pred_region
          _
        $region118: #{daud_v2_forward.1} parent=109 // pred_fallthru
          _
        // Predicated region
        $region119: #{daud_v2_forward.1} parent=109 // pred_check
          %p1397 = pneg %p402
        $region120: #{daud_v2_forward.1} parent=109 // pred_check_branch
          %1399 = sbr.rel (%p1397) target = $region122
        $region121: #{daud_v2_forward.1} parent=109 // pred_region
          _
        $region122: #{daud_v2_forward.1} parent=109 // pred_fallthru
          _
      $region110: #{daud_v2_forward.1} parent=5 // pred_fallthru
        _
      %p1400 = scmp.le.s32.totalorder 2, %s29
      // Predicated region
      $region123: #{daud_v2_forward.1} parent=5 // pred_check
        %p1401 = pneg %p1400
      $region124: #{daud_v2_forward.1} parent=5 // pred_check_branch
        %1403 = sbr.rel (%p1401) target = $region126
      $region125: #{daud_v2_forward.1} parent=5 // pred_region
        %s1404 = ssub.s32 %s29, 2
        // Predicated region
        $region127: #{daud_v2_forward.1} parent=125 // pred_check
          %p1405 = pneg %p380
        $region128: #{daud_v2_forward.1} parent=125 // pred_check_branch
          %1407 = sbr.rel (%p1405) target = $region130
        $region129: #{daud_v2_forward.1} parent=125 // pred_region
          %p1408 = scmp.lt.s32.totalorder %s40, 1
          %s1409 = scalar_select %p1408, %s40, 1
          %p1410 = scmp.lt.s32.totalorder %s41, 0
          %s1411 = scalar_select %p1410, %s41, 0
          %s1412 = smul.addr %s1409, 4
          %s1413 = sadd.s32 %s1411, %s1412
          %s1414 = smul.addr %s1413, 8
          %s1415 = scalar_lea.vmem %s15, %s1414
        $region130: #{daud_v2_forward.1} parent=125 // pred_fallthru
          _
        // Predicated region
        $region131: #{daud_v2_forward.1} parent=125 // pred_check
          %p1416 = pneg %p408
        $region132: #{daud_v2_forward.1} parent=125 // pred_check_branch
          %1418 = sbr.rel (%p1416) target = $region134
        $region133: #{daud_v2_forward.1} parent=125 // pred_region
          %p1419 = scmp.lt.s32.totalorder %s40, 1
          %s1420 = scalar_select %p1419, %s40, 1
          %p1421 = scmp.lt.s32.totalorder %s41, 0
          %s1422 = scalar_select %p1421, %s41, 0
          %s1423 = smul.addr %s1420, 2
          %s1424 = sadd.s32 %s1422, %s1423
          %s1425 = smul.addr %s1424, 8
          %s1426 = scalar_lea.vmem %s16, %s1425
        $region134: #{daud_v2_forward.1} parent=125 // pred_fallthru
          _
      $region126: #{daud_v2_forward.1} parent=5 // pred_fallthru
        _
    $region6: #{daud_v2_forward.1} parent=1 // loop_footer
      %s33 = sadd.s32 1, %s29
    $region7: #{daud_v2_forward.1} parent=1 // loop_footer_branch
      %28 = sbr.rel target = $region3
    $region8: #{daud_v2_forward.1} parent=1 // loop_exit
      _

</llo_original>
